<compile_context>
chip_gen: v6e
topology: v6e:2x2x1
jax: 0.10.0
libtpu: 0.0.40
codegen_flags: <defaults>
</compile_context>

<pallas_src>
import math
import jax
import jax.numpy as jnp
from jax.experimental import pallas as pl
from jax.experimental.pallas import tpu as pltpu  # noqa: F401 (kept for scaling path)

# ---- small synthetic config (n_embd % n_head == 0) ----
B = 2          # batch
T = 8          # sequence length (power of 2 -> sequence id via shift)
C = 32         # n_embd
H = 4          # n_head
D = C // H     # head dim
N = B * T      # flattened (batch*seq) rows
EPS = 1e-5     # torch.nn.LayerNorm default eps
LOG2_T = int(math.log2(T))
assert (1 << LOG2_T) == T  # block-diagonal mask trick requires power-of-two T


def _layernorm(v, w, b):
    mu = jnp.mean(v, axis=-1, keepdims=True)
    var = jnp.mean((v - mu) * (v - mu), axis=-1, keepdims=True)
    return (v - mu) * jax.lax.rsqrt(var + EPS) * w + b


def _gelu_tanh(h):
    # nn.GELU(approximate='tanh')
    return 0.5 * h * (1.0 + jnp.tanh(0.7978845608028654 * (h + 0.044715 * h * h * h)))


def block_kernel(x_ref,
                 ln1w_ref, ln1b_ref,
                 wattn_ref, battn_ref,
                 wproj_ref, bproj_ref,
                 ln2w_ref, ln2b_ref,
                 wfc_ref, bfc_ref,
                 wproj2_ref, bproj2_ref,
                 out_ref):
    x = x_ref[...]                                  # (N, C) f32, N = B*T

    # ---- ln_1 + fused QKV projection (bf16 operands, f32 accumulation) ----
    # 1/sqrt(D) is pre-folded into the Q columns of wattn/battn (weight prep).
    ln1 = _layernorm(x, ln1w_ref[...], ln1b_ref[...])
    qkv = jnp.dot(ln1.astype(jnp.bfloat16), wattn_ref[...],
                  preferred_element_type=jnp.float32) + battn_ref[...]   # (N, 3C)

    # Head packing: one reshape + one leading-axis transpose (instead of 3*H
    # narrow lane slices + stacks); q3/k3/v3 are leading-axis slices.
    qkv3 = jnp.transpose(qkv.reshape(N, 3 * H, D), (1, 0, 2)).astype(jnp.bfloat16)
    q3 = qkv3[0:H]                                  # (H, N, D)
    k3 = qkv3[H:2 * H]
    v3 = qkv3[2 * H:3 * H]

    # (H, N, N) scores for all heads / all sequences at once
    s = jnp.einsum('hqd,hkd->hqk', q3, k3, preferred_element_type=jnp.float32)

    # Head-invariant block-diagonal causal mask, built once at (N, N):
    # attend only within the same sequence (row>>log2(T) == col>>log2(T)) and causally.
    row = jax.lax.broadcasted_iota(jnp.int32, (N, N), 0)
    col = jax.lax.broadcasted_iota(jnp.int32, (N, N), 1)
    mask = (jnp.right_shift(row, LOG2_T) == jnp.right_shift(col, LOG2_T)) & (row >= col)
    s = jnp.where(mask[None, :, :], s, -1e30)       # finite fill: no inf-inf NaN hazard

    m = jnp.max(s, axis=-1, keepdims=True)
    p = jnp.exp(s - m)
    inv = pl.reciprocal(jnp.sum(p, axis=-1, keepdims=True), approx=True)   # EUP, ~free
    p = p * inv

    # (H, N, D) attention outputs, batched over heads; merge heads in registers
    y3 = jnp.einsum('hqk,hkd->hqd', p.astype(jnp.bfloat16), v3,
                    preferred_element_type=jnp.float32)
    y = jnp.transpose(y3, (1, 0, 2)).reshape(N, C)   # (N, C), no VMEM scratch

    attn_out = jnp.dot(y.astype(jnp.bfloat16), wproj_ref[...],
                       preferred_element_type=jnp.float32) + bproj_ref[...]
    x1 = x + attn_out

    # ---- ln_2 + MLP (GELU tanh) ----
    ln2 = _layernorm(x1, ln2w_ref[...], ln2b_ref[...])
    hdn = jnp.dot(ln2.astype(jnp.bfloat16), wfc_ref[...],
                  preferred_element_type=jnp.float32) + bfc_ref[...]      # (N, 4C)
    g = _gelu_tanh(hdn)
    mlp_out = jnp.dot(g.astype(jnp.bfloat16), wproj2_ref[...],
                      preferred_element_type=jnp.float32) + bproj2_ref[...]

    out_ref[...] = x1 + mlp_out


def prepare_block_params(params):
    """One-time weight prep (call once, outside the hot path):
       * fold 1/sqrt(D) into the Q columns of the fused QKV projection,
       * cast matmul weights to bf16 (MXU-native operands, f32 accumulation).
       LayerNorm params and biases stay f32 (added after f32 accumulation)."""
    (ln1w, ln1b, wattn, battn, wproj, bproj,
     ln2w, ln2b, wfc, bfc, wproj2, bproj2) = params
    scale = 1.0 / math.sqrt(D)
    wattn = wattn.at[:, 0:C].multiply(scale)
    battn = battn.at[:, 0:C].multiply(scale)
    return (ln1w, ln1b,
            wattn.astype(jnp.bfloat16), battn,
            wproj.astype(jnp.bfloat16), bproj,
            ln2w, ln2b,
            wfc.astype(jnp.bfloat16), bfc,
            wproj2.astype(jnp.bfloat16), bproj2)


def gpt2_block(x, prepared_params):
    Bx, Tx, Cx = x.shape
    # Collapse batch into the row (sublane) dimension: a single kernel step
    # processes the whole (B*T, C) slab -> no serial-grid overhead, fuller matmuls.
    # (On v7x at real dims, reintroduce a parallel row grid to use both TCs.)
    x2 = x.reshape(Bx * Tx, Cx)
    out = pl.pallas_call(
        block_kernel,
        out_shape=jax.ShapeDtypeStruct((Bx * Tx, Cx), jnp.float32),
    )(x2, *prepared_params)
    return out.reshape(Bx, Tx, Cx)


# ---- pure-JAX f32 reference (for correctness check) ----
def gpt2_block_ref(x, params):
    (ln1w, ln1b, wattn, battn, wproj, bproj,
     ln2w, ln2b, wfc, bfc, wproj2, bproj2) = params

    def ln(v, w, b):
        mu = jnp.mean(v, -1, keepdims=True)
        var = jnp.mean((v - mu) ** 2, -1, keepdims=True)
        return (v - mu) / jnp.sqrt(var + EPS) * w + b

    l1 = ln(x, ln1w, ln1b)
    qkv = l1 @ wattn + battn
    q, k, v = jnp.split(qkv, 3, axis=-1)
    q = q.reshape(B, T, H, D).transpose(0, 2, 1, 3)
    k = k.reshape(B, T, H, D).transpose(0, 2, 1, 3)
    v = v.reshape(B, T, H, D).transpose(0, 2, 1, 3)
    s = jnp.einsum("bhqd,bhkd->bhqk", q, k) / math.sqrt(D)
    mask = jnp.tril(jnp.ones((T, T), bool))
    s = jnp.where(mask, s, -jnp.inf)
    p = jax.nn.softmax(s, axis=-1)
    y = jnp.einsum("bhqk,bhkd->bhqd", p, v).transpose(0, 2, 1, 3).reshape(B, T, C)
    x1 = x + (y @ wproj + bproj)
    l2 = ln(x1, ln2w, ln2b)
    hdn = l2 @ wfc + bfc
    g = 0.5 * hdn * (1.0 + jnp.tanh(0.7978845608028654 * (hdn + 0.044715 * hdn ** 3)))
    return x1 + (g @ wproj2 + bproj2)


if __name__ == "__main__":
    key = jax.random.PRNGKey(0)
    ks = jax.random.split(key, 8)

    x = jax.random.normal(ks[0], (B, T, C), jnp.float32)

    # deterministic parameter init (synthetic; shapes match the module)
    ln1w = jnp.ones((1, C), jnp.float32)
    ln1b = jnp.zeros((1, C), jnp.float32)
    wattn = jax.random.normal(ks[1], (C, 3 * C), jnp.float32) * 0.02
    battn = jax.random.normal(ks[2], (1, 3 * C), jnp.float32) * 0.02
    wproj = jax.random.normal(ks[3], (C, C), jnp.float32) * 0.02
    bproj = jax.random.normal(ks[4], (1, C), jnp.float32) * 0.02
    ln2w = jnp.ones((1, C), jnp.float32)
    ln2b = jnp.zeros((1, C), jnp.float32)
    wfc = jax.random.normal(ks[5], (C, 4 * C), jnp.float32) * 0.02
    bfc = jax.random.normal(ks[6], (1, 4 * C), jnp.float32) * 0.02
    wproj2 = jax.random.normal(ks[7], (4 * C, C), jnp.float32) * 0.02
    bproj2 = jnp.zeros((1, C), jnp.float32)

    params = (ln1w, ln1b, wattn, battn, wproj, bproj,
              ln2w, ln2b, wfc, bfc, wproj2, bproj2)

    prepared = prepare_block_params(params)   # one-time: scale fold + bf16 casts

    out = gpt2_block(x, prepared)
    jax.block_until_ready(out)

    ref = gpt2_block_ref(x, params)
    assert out.shape == (B, T, C)
    # bf16 MXU operands + approx reciprocal -> compare against the f32 reference
    # with a correspondingly looser (but structurally tight) tolerance.
    max_err = float(jnp.max(jnp.abs(out - ref)))
    assert jnp.allclose(out, ref, atol=2e-2, rtol=2e-2), (
        f"mismatch vs JAX reference (max abs err {max_err})")

    print("KERNEL_OK")
</pallas_src>

<mosaic_0001>
module attributes {stable_mosaic.version = 11 : i64} {
  func.func @block_kernel(%arg0: memref<16x32xf32, #tpu.memory_space<vmem>>, %arg1: memref<1x32xf32, #tpu.memory_space<vmem>>, %arg2: memref<1x32xf32, #tpu.memory_space<vmem>>, %arg3: memref<32x96xbf16, #tpu.memory_space<vmem>>, %arg4: memref<1x96xf32, #tpu.memory_space<vmem>>, %arg5: memref<32x32xbf16, #tpu.memory_space<vmem>>, %arg6: memref<1x32xf32, #tpu.memory_space<vmem>>, %arg7: memref<1x32xf32, #tpu.memory_space<vmem>>, %arg8: memref<1x32xf32, #tpu.memory_space<vmem>>, %arg9: memref<32x128xbf16, #tpu.memory_space<vmem>>, %arg10: memref<1x128xf32, #tpu.memory_space<vmem>>, %arg11: memref<128x32xbf16, #tpu.memory_space<vmem>>, %arg12: memref<1x32xf32, #tpu.memory_space<vmem>>, %arg13: memref<16x32xf32, #tpu.memory_space<vmem>>) attributes {dimension_semantics = [], scalar_prefetch = 0 : i64, scratch_operands = 0 : i64, tpu.core_type = #tpu.core_type<tc>} {
    %c0 = arith.constant 0 : index
    %c0_0 = arith.constant 0 : index
    %0 = vector.load %arg0[%c0, %c0_0] : memref<16x32xf32, #tpu.memory_space<vmem>>, vector<16x32xf32>
    %c0_1 = arith.constant 0 : index
    %c0_2 = arith.constant 0 : index
    %1 = vector.load %arg1[%c0_1, %c0_2] : memref<1x32xf32, #tpu.memory_space<vmem>>, vector<1x32xf32>
    %c0_3 = arith.constant 0 : index
    %c0_4 = arith.constant 0 : index
    %2 = vector.load %arg2[%c0_3, %c0_4] : memref<1x32xf32, #tpu.memory_space<vmem>>, vector<1x32xf32>
    %cst = arith.constant dense<0.000000e+00> : vector<16xf32>
    %3 = vector.multi_reduction <add>, %0, %cst [1] : vector<16x32xf32> to vector<16xf32>
    %4 = vector.shape_cast %3 : vector<16xf32> to vector<16x1xf32>
    %cst_5 = arith.constant 3.200000e+01 : f32
    %5 = vector.broadcast %cst_5 : f32 to vector<16x1xf32>
    %6 = arith.divf %4, %5 : vector<16x1xf32>
    %7 = vector.broadcast %6 : vector<16x1xf32> to vector<16x32xf32>
    %8 = arith.subf %0, %7 : vector<16x32xf32>
    %9 = vector.broadcast %6 : vector<16x1xf32> to vector<16x32xf32>
    %10 = arith.subf %0, %9 : vector<16x32xf32>
    %11 = arith.mulf %8, %10 : vector<16x32xf32>
    %cst_6 = arith.constant dense<0.000000e+00> : vector<16xf32>
    %12 = vector.multi_reduction <add>, %11, %cst_6 [1] : vector<16x32xf32> to vector<16xf32>
    %13 = vector.shape_cast %12 : vector<16xf32> to vector<16x1xf32>
    %cst_7 = arith.constant 3.200000e+01 : f32
    %14 = vector.broadcast %cst_7 : f32 to vector<16x1xf32>
    %15 = arith.divf %13, %14 : vector<16x1xf32>
    %16 = vector.broadcast %6 : vector<16x1xf32> to vector<16x32xf32>
    %17 = arith.subf %0, %16 : vector<16x32xf32>
    %cst_8 = arith.constant 9.99999974E-6 : f32
    %18 = vector.broadcast %cst_8 : f32 to vector<16x1xf32>
    %19 = arith.addf %15, %18 : vector<16x1xf32>
    %20 = math.rsqrt %19 : vector<16x1xf32>
    %21 = vector.broadcast %20 : vector<16x1xf32> to vector<16x32xf32>
    %22 = arith.mulf %17, %21 : vector<16x32xf32>
    %23 = vector.broadcast %1 : vector<1x32xf32> to vector<16x32xf32>
    %24 = arith.mulf %22, %23 : vector<16x32xf32>
    %25 = vector.broadcast %2 : vector<1x32xf32> to vector<16x32xf32>
    %26 = arith.addf %24, %25 : vector<16x32xf32>
    %27 = arith.truncf %26 : vector<16x32xf32> to vector<16x32xbf16>
    %c0_9 = arith.constant 0 : index
    %c0_10 = arith.constant 0 : index
    %28 = vector.load %arg3[%c0_9, %c0_10] : memref<32x96xbf16, #tpu.memory_space<vmem>>, vector<32x96xbf16>
    %cst_11 = arith.constant dense<0.000000e+00> : vector<16x96xf32>
    %29 = tpu.matmul %27, %28, %cst_11 {dimension_numbers = #tpu.dot_dimension_numbers<[1], [0], [0], [1], [0, 0, 1, 1], [], []>} : vector<16x32xbf16>, vector<32x96xbf16>, vector<16x96xf32> -> vector<16x96xf32>
    %c0_12 = arith.constant 0 : index
    %c0_13 = arith.constant 0 : index
    %30 = vector.load %arg4[%c0_12, %c0_13] : memref<1x96xf32, #tpu.memory_space<vmem>>, vector<1x96xf32>
    %31 = vector.broadcast %30 : vector<1x96xf32> to vector<16x96xf32>
    %32 = arith.addf %29, %31 : vector<16x96xf32>
    %33 = vector.shape_cast %32 : vector<16x96xf32> to vector<16x12x8xf32>
    %34 = tpu.transpose %33, [1, 0, 2] : vector<16x12x8xf32> -> vector<12x16x8xf32>
    %35 = arith.truncf %34 : vector<12x16x8xf32> to vector<12x16x8xbf16>
    %36 = vector.extract_strided_slice %35 {offsets = [0, 0, 0], sizes = [4, 16, 8], strides = [1, 1, 1]} : vector<12x16x8xbf16> to vector<4x16x8xbf16>
    %37 = vector.extract_strided_slice %35 {offsets = [4, 0, 0], sizes = [4, 16, 8], strides = [1, 1, 1]} : vector<12x16x8xbf16> to vector<4x16x8xbf16>
    %38 = vector.extract_strided_slice %35 {offsets = [8, 0, 0], sizes = [4, 16, 8], strides = [1, 1, 1]} : vector<12x16x8xbf16> to vector<4x16x8xbf16>
    "tpu.trace_start"() <{level = 10 : i32, message = "hqd,hkd->hqk"}> : () -> ()
    %cst_14 = arith.constant dense<0.000000e+00> : vector<4x16x16xf32>
    %39 = tpu.matmul %36, %37, %cst_14 {dimension_numbers = #tpu.dot_dimension_numbers<[2], [2], [1], [1], [0, 0, 0, 1, 1, 1], [0], [0]>} : vector<4x16x8xbf16>, vector<4x16x8xbf16>, vector<4x16x16xf32> -> vector<4x16x16xf32>
    "tpu.trace_stop"() : () -> ()
    %40 = tpu.iota {dimensions = array<i32: 0>} : vector<16x16xi32>
    %41 = tpu.iota {dimensions = array<i32: 1>} : vector<16x16xi32>
    %c3_i32 = arith.constant 3 : i32
    %42 = vector.broadcast %c3_i32 : i32 to vector<16x16xi32>
    %43 = arith.shrsi %40, %42 : vector<16x16xi32>
    %c3_i32_15 = arith.constant 3 : i32
    %44 = vector.broadcast %c3_i32_15 : i32 to vector<16x16xi32>
    %45 = arith.shrsi %41, %44 : vector<16x16xi32>
    %46 = arith.cmpi eq, %43, %45 : vector<16x16xi32>
    %47 = arith.cmpi sge, %40, %41 : vector<16x16xi32>
    %48 = arith.andi %46, %47 : vector<16x16xi1>
    %49 = vector.shape_cast %48 : vector<16x16xi1> to vector<1x16x16xi1>
    %cst_16 = arith.constant -1.000000e+30 : f32
    %50 = vector.shape_cast %49 : vector<1x16x16xi1> to vector<1x16x16xi1>
    %51 = vector.broadcast %50 : vector<1x16x16xi1> to vector<4x16x16xi1>
    %52 = vector.broadcast %cst_16 : f32 to vector<4x16x16xf32>
    %53 = arith.select %51, %39, %52 : vector<4x16x16xi1>, vector<4x16x16xf32>
    %cst_17 = arith.constant dense<0xFF800000> : vector<4x16xf32>
    %54 = vector.multi_reduction <maximumf>, %53, %cst_17 [2] : vector<4x16x16xf32> to vector<4x16xf32>
    %55 = vector.shape_cast %54 : vector<4x16xf32> to vector<4x16x1xf32>
    %56 = vector.broadcast %55 : vector<4x16x1xf32> to vector<4x16x16xf32>
    %57 = arith.subf %53, %56 : vector<4x16x16xf32>
    %58 = math.exp %57 : vector<4x16x16xf32>
    %cst_18 = arith.constant dense<0.000000e+00> : vector<4x16xf32>
    %59 = vector.multi_reduction <add>, %58, %cst_18 [2] : vector<4x16x16xf32> to vector<4x16xf32>
    %60 = vector.shape_cast %59 : vector<4x16xf32> to vector<4x16x1xf32>
    %61 = tpu.reciprocal %60 {approx = true} : vector<4x16x1xf32> -> vector<4x16x1xf32>
    %62 = vector.broadcast %61 : vector<4x16x1xf32> to vector<4x16x16xf32>
    %63 = arith.mulf %58, %62 : vector<4x16x16xf32>
    %64 = arith.truncf %63 : vector<4x16x16xf32> to vector<4x16x16xbf16>
    "tpu.trace_start"() <{level = 10 : i32, message = "hqk,hkd->hqd"}> : () -> ()
    %cst_19 = arith.constant dense<0.000000e+00> : vector<4x16x8xf32>
    %65 = tpu.matmul %64, %38, %cst_19 {dimension_numbers = #tpu.dot_dimension_numbers<[2], [1], [1], [2], [0, 0, 0, 1, 1, 2], [0], [0]>} : vector<4x16x16xbf16>, vector<4x16x8xbf16>, vector<4x16x8xf32> -> vector<4x16x8xf32>
    "tpu.trace_stop"() : () -> ()
    %66 = tpu.transpose %65, [1, 0, 2] : vector<4x16x8xf32> -> vector<16x4x8xf32>
    %67 = vector.shape_cast %66 : vector<16x4x8xf32> to vector<16x32xf32>
    %68 = arith.truncf %67 : vector<16x32xf32> to vector<16x32xbf16>
    %c0_20 = arith.constant 0 : index
    %c0_21 = arith.constant 0 : index
    %69 = vector.load %arg5[%c0_20, %c0_21] : memref<32x32xbf16, #tpu.memory_space<vmem>>, vector<32x32xbf16>
    %cst_22 = arith.constant dense<0.000000e+00> : vector<16x32xf32>
    %70 = tpu.matmul %68, %69, %cst_22 {dimension_numbers = #tpu.dot_dimension_numbers<[1], [0], [0], [1], [0, 0, 1, 1], [], []>} : vector<16x32xbf16>, vector<32x32xbf16>, vector<16x32xf32> -> vector<16x32xf32>
    %c0_23 = arith.constant 0 : index
    %c0_24 = arith.constant 0 : index
    %71 = vector.load %arg6[%c0_23, %c0_24] : memref<1x32xf32, #tpu.memory_space<vmem>>, vector<1x32xf32>
    %72 = vector.broadcast %71 : vector<1x32xf32> to vector<16x32xf32>
    %73 = arith.addf %70, %72 : vector<16x32xf32>
    %74 = arith.addf %0, %73 : vector<16x32xf32>
    %c0_25 = arith.constant 0 : index
    %c0_26 = arith.constant 0 : index
    %75 = vector.load %arg7[%c0_25, %c0_26] : memref<1x32xf32, #tpu.memory_space<vmem>>, vector<1x32xf32>
    %c0_27 = arith.constant 0 : index
    %c0_28 = arith.constant 0 : index
    %76 = vector.load %arg8[%c0_27, %c0_28] : memref<1x32xf32, #tpu.memory_space<vmem>>, vector<1x32xf32>
    %cst_29 = arith.constant dense<0.000000e+00> : vector<16xf32>
    %77 = vector.multi_reduction <add>, %74, %cst_29 [1] : vector<16x32xf32> to vector<16xf32>
    %78 = vector.shape_cast %77 : vector<16xf32> to vector<16x1xf32>
    %cst_30 = arith.constant 3.200000e+01 : f32
    %79 = vector.broadcast %cst_30 : f32 to vector<16x1xf32>
    %80 = arith.divf %78, %79 : vector<16x1xf32>
    %81 = vector.broadcast %80 : vector<16x1xf32> to vector<16x32xf32>
    %82 = arith.subf %74, %81 : vector<16x32xf32>
    %83 = vector.broadcast %80 : vector<16x1xf32> to vector<16x32xf32>
    %84 = arith.subf %74, %83 : vector<16x32xf32>
    %85 = arith.mulf %82, %84 : vector<16x32xf32>
    %cst_31 = arith.constant dense<0.000000e+00> : vector<16xf32>
    %86 = vector.multi_reduction <add>, %85, %cst_31 [1] : vector<16x32xf32> to vector<16xf32>
    %87 = vector.shape_cast %86 : vector<16xf32> to vector<16x1xf32>
    %cst_32 = arith.constant 3.200000e+01 : f32
    %88 = vector.broadcast %cst_32 : f32 to vector<16x1xf32>
    %89 = arith.divf %87, %88 : vector<16x1xf32>
    %90 = vector.broadcast %80 : vector<16x1xf32> to vector<16x32xf32>
    %91 = arith.subf %74, %90 : vector<16x32xf32>
    %cst_33 = arith.constant 9.99999974E-6 : f32
    %92 = vector.broadcast %cst_33 : f32 to vector<16x1xf32>
    %93 = arith.addf %89, %92 : vector<16x1xf32>
    %94 = math.rsqrt %93 : vector<16x1xf32>
    %95 = vector.broadcast %94 : vector<16x1xf32> to vector<16x32xf32>
    %96 = arith.mulf %91, %95 : vector<16x32xf32>
    %97 = vector.broadcast %75 : vector<1x32xf32> to vector<16x32xf32>
    %98 = arith.mulf %96, %97 : vector<16x32xf32>
    %99 = vector.broadcast %76 : vector<1x32xf32> to vector<16x32xf32>
    %100 = arith.addf %98, %99 : vector<16x32xf32>
    %101 = arith.truncf %100 : vector<16x32xf32> to vector<16x32xbf16>
    %c0_34 = arith.constant 0 : index
    %c0_35 = arith.constant 0 : index
    %102 = vector.load %arg9[%c0_34, %c0_35] : memref<32x128xbf16, #tpu.memory_space<vmem>>, vector<32x128xbf16>
    %cst_36 = arith.constant dense<0.000000e+00> : vector<16x128xf32>
    %103 = tpu.matmul %101, %102, %cst_36 {dimension_numbers = #tpu.dot_dimension_numbers<[1], [0], [0], [1], [0, 0, 1, 1], [], []>} : vector<16x32xbf16>, vector<32x128xbf16>, vector<16x128xf32> -> vector<16x128xf32>
    %c0_37 = arith.constant 0 : index
    %c0_38 = arith.constant 0 : index
    %104 = vector.load %arg10[%c0_37, %c0_38] : memref<1x128xf32, #tpu.memory_space<vmem>>, vector<1x128xf32>
    %105 = vector.broadcast %104 : vector<1x128xf32> to vector<16x128xf32>
    %106 = arith.addf %103, %105 : vector<16x128xf32>
    %cst_39 = arith.constant 5.000000e-01 : f32
    %107 = vector.broadcast %cst_39 : f32 to vector<16x128xf32>
    %108 = arith.mulf %107, %106 : vector<16x128xf32>
    %cst_40 = arith.constant 4.471500e-02 : f32
    %109 = vector.broadcast %cst_40 : f32 to vector<16x128xf32>
    %110 = arith.mulf %109, %106 : vector<16x128xf32>
    %111 = arith.mulf %110, %106 : vector<16x128xf32>
    %112 = arith.mulf %111, %106 : vector<16x128xf32>
    %113 = arith.addf %106, %112 : vector<16x128xf32>
    %cst_41 = arith.constant 0.797884583 : f32
    %114 = vector.broadcast %cst_41 : f32 to vector<16x128xf32>
    %115 = arith.mulf %114, %113 : vector<16x128xf32>
    %116 = math.tanh %115 : vector<16x128xf32>
    %cst_42 = arith.constant 1.000000e+00 : f32
    %117 = vector.broadcast %cst_42 : f32 to vector<16x128xf32>
    %118 = arith.addf %117, %116 : vector<16x128xf32>
    %119 = arith.mulf %108, %118 : vector<16x128xf32>
    %120 = arith.truncf %119 : vector<16x128xf32> to vector<16x128xbf16>
    %c0_43 = arith.constant 0 : index
    %c0_44 = arith.constant 0 : index
    %121 = vector.load %arg11[%c0_43, %c0_44] : memref<128x32xbf16, #tpu.memory_space<vmem>>, vector<128x32xbf16>
    %cst_45 = arith.constant dense<0.000000e+00> : vector<16x32xf32>
    %122 = tpu.matmul %120, %121, %cst_45 {dimension_numbers = #tpu.dot_dimension_numbers<[1], [0], [0], [1], [0, 0, 1, 1], [], []>} : vector<16x128xbf16>, vector<128x32xbf16>, vector<16x32xf32> -> vector<16x32xf32>
    %c0_46 = arith.constant 0 : index
    %c0_47 = arith.constant 0 : index
    %123 = vector.load %arg12[%c0_46, %c0_47] : memref<1x32xf32, #tpu.memory_space<vmem>>, vector<1x32xf32>
    %124 = vector.broadcast %123 : vector<1x32xf32> to vector<16x32xf32>
    %125 = arith.addf %122, %124 : vector<16x32xf32>
    %126 = arith.addf %74, %125 : vector<16x32xf32>
    %c0_48 = arith.constant 0 : index
    %c0_49 = arith.constant 0 : index
    %127 = vector.load %arg13[%c0_48, %c0_49] : memref<16x32xf32, #tpu.memory_space<vmem>>, vector<16x32xf32>
    tpu.vector_store %arg13[%c0_48, %c0_49], %126 {strides = array<i32>} : memref<16x32xf32, #tpu.memory_space<vmem>>, vector<16x32xf32>,
    return
  }
}

</mosaic_0001>

<llo_original>
// kernel: tpu_custom_call.1
$region0: #{tpu_custom_call.1}
  #allocation0 [shape = 'u32[]', space=smem, size = 0x4, offset = 0x4, fixed_abs, tag = 'smem constant byte address 0x4 - core index']
  #allocation1 [shape = 'u32[144,128]{1,0:T(1,128)}', space=vmem, size = 0x12000, scoped, tag = 'internal scratch']
  %s0 = inlined_call_operand.vmem [shape: f32[16,32], index: 0, kind: input, shape index: {}]
  %s1 = inlined_call_operand.vmem [shape: f32[1,32], index: 1, kind: input, shape index: {}]
  %s2 = inlined_call_operand.vmem [shape: f32[1,32], index: 2, kind: input, shape index: {}]
  %s3 = inlined_call_operand.vmem [shape: bf16[32,96], index: 3, kind: input, shape index: {}]
  %s4 = inlined_call_operand.vmem [shape: f32[1,96], index: 4, kind: input, shape index: {}]
  %s5 = inlined_call_operand.vmem [shape: bf16[32,32], index: 5, kind: input, shape index: {}]
  %s6 = inlined_call_operand.vmem [shape: f32[1,32], index: 6, kind: input, shape index: {}]
  %s7 = inlined_call_operand.vmem [shape: f32[1,32], index: 7, kind: input, shape index: {}]
  %s8 = inlined_call_operand.vmem [shape: f32[1,32], index: 8, kind: input, shape index: {}]
  %s9 = inlined_call_operand.vmem [shape: bf16[32,128], index: 9, kind: input, shape index: {}]
  %s10 = inlined_call_operand.vmem [shape: f32[1,128], index: 10, kind: input, shape index: {}]
  %s11 = inlined_call_operand.vmem [shape: bf16[128,32], index: 11, kind: input, shape index: {}]
  %s12 = inlined_call_operand.vmem [shape: f32[1,32], index: 12, kind: input, shape index: {}]
  %s13 = inlined_call_operand.hbm [shape: f32[16,32], index: 13, kind: output, shape index: {}]
  %s14 = sld [smem:[#allocation0]]
  $region62: #{tpu_custom_call.1} parent=0
    _
  %s16 = ssub.s32 1, %s14
  %s17 = scalar_select 0, %s16, %s14
  $region1: #{tpu_custom_call.1} parent=0
    #allocation2 [shape = 'u8[8192]{0}', space=vmem, size = 0x2000, scoped, tag = 'output window, operand 0, single buffered']
    #allocation3 [shape = 's32[1]{0}', space=sflag, size = 0x4, scoped, tag = 'scoped memory for tpu_custom_call.1']
    %18 = vsyncpa [#allocation3], 0
    // Predicated region
    $region2: #{tpu_custom_call.1} parent=1 // pred_check
      _
    $region3: #{tpu_custom_call.1} parent=1 // pred_check_branch
      %20 = sbr.rel (0) target = $region5
    $region4: #{tpu_custom_call.1} parent=1 // pred_region
      _
    $region5: #{tpu_custom_call.1} parent=1 // pred_fallthru
      _
    // Predicated region
    $region6: #{tpu_custom_call.1} parent=1 // pred_check
      _
    $region7: #{tpu_custom_call.1} parent=1 // pred_check_branch
      %22 = sbr.rel (0) target = $region9
    $region8: #{tpu_custom_call.1} parent=1 // pred_region
      _
    $region9: #{tpu_custom_call.1} parent=1 // pred_fallthru
      _
    // Predicated region
    $region10: #{tpu_custom_call.1} parent=1 // pred_check
      _
    $region11: #{tpu_custom_call.1} parent=1 // pred_check_branch
      %24 = sbr.rel (0) target = $region13
    $region12: #{tpu_custom_call.1} parent=1 // pred_region
      _
    $region13: #{tpu_custom_call.1} parent=1 // pred_fallthru
      _
    // Predicated region
    $region14: #{tpu_custom_call.1} parent=1 // pred_check
      _
    $region15: #{tpu_custom_call.1} parent=1 // pred_check_branch
      %26 = sbr.rel (0) target = $region17
    $region16: #{tpu_custom_call.1} parent=1 // pred_region
      _
    $region17: #{tpu_custom_call.1} parent=1 // pred_fallthru
      _
    // Predicated region
    $region18: #{tpu_custom_call.1} parent=1 // pred_check
      _
    $region19: #{tpu_custom_call.1} parent=1 // pred_check_branch
      %28 = sbr.rel (0) target = $region21
    $region20: #{tpu_custom_call.1} parent=1 // pred_region
      _
    $region21: #{tpu_custom_call.1} parent=1 // pred_fallthru
      _
    // Predicated region
    $region22: #{tpu_custom_call.1} parent=1 // pred_check
      _
    $region23: #{tpu_custom_call.1} parent=1 // pred_check_branch
      %30 = sbr.rel (0) target = $region25
    $region24: #{tpu_custom_call.1} parent=1 // pred_region
      _
    $region25: #{tpu_custom_call.1} parent=1 // pred_fallthru
      _
    // Predicated region
    $region26: #{tpu_custom_call.1} parent=1 // pred_check
      _
    $region27: #{tpu_custom_call.1} parent=1 // pred_check_branch
      %32 = sbr.rel (0) target = $region29
    $region28: #{tpu_custom_call.1} parent=1 // pred_region
      _
    $region29: #{tpu_custom_call.1} parent=1 // pred_fallthru
      _
    // Predicated region
    $region30: #{tpu_custom_call.1} parent=1 // pred_check
      _
    $region31: #{tpu_custom_call.1} parent=1 // pred_check_branch
      %34 = sbr.rel (0) target = $region33
    $region32: #{tpu_custom_call.1} parent=1 // pred_region
      _
    $region33: #{tpu_custom_call.1} parent=1 // pred_fallthru
      _
    // Predicated region
    $region34: #{tpu_custom_call.1} parent=1 // pred_check
      _
    $region35: #{tpu_custom_call.1} parent=1 // pred_check_branch
      %36 = sbr.rel (0) target = $region37
    $region36: #{tpu_custom_call.1} parent=1 // pred_region
      _
    $region37: #{tpu_custom_call.1} parent=1 // pred_fallthru
      _
    // Predicated region
    $region38: #{tpu_custom_call.1} parent=1 // pred_check
      _
    $region39: #{tpu_custom_call.1} parent=1 // pred_check_branch
      %38 = sbr.rel (0) target = $region41
    $region40: #{tpu_custom_call.1} parent=1 // pred_region
      _
    $region41: #{tpu_custom_call.1} parent=1 // pred_fallthru
      _
    // Predicated region
    $region42: #{tpu_custom_call.1} parent=1 // pred_check
      _
    $region43: #{tpu_custom_call.1} parent=1 // pred_check_branch
      %40 = sbr.rel (0) target = $region45
    $region44: #{tpu_custom_call.1} parent=1 // pred_region
      _
    $region45: #{tpu_custom_call.1} parent=1 // pred_fallthru
      _
    // Predicated region
    $region46: #{tpu_custom_call.1} parent=1 // pred_check
      _
    $region47: #{tpu_custom_call.1} parent=1 // pred_check_branch
      %42 = sbr.rel (0) target = $region49
    $region48: #{tpu_custom_call.1} parent=1 // pred_region
      _
    $region49: #{tpu_custom_call.1} parent=1 // pred_fallthru
      _
    // Predicated region
    $region50: #{tpu_custom_call.1} parent=1 // pred_check
      _
    $region51: #{tpu_custom_call.1} parent=1 // pred_check_branch
      %44 = sbr.rel (0) target = $region53
    $region52: #{tpu_custom_call.1} parent=1 // pred_region
      _
    $region53: #{tpu_custom_call.1} parent=1 // pred_fallthru
      _
    %v46 = vld [vmem:[%s0] sm:$0xff]
    %v47 = vld [vmem:[%s0 + $0x8] sm:$0xff]
    %v48 = vld [vmem:[%s1] sm:$0x1]
    %v49 = vld [vmem:[%s2] sm:$0x1]
    %vm50 = vcmask 261120
    %v51 = vsel %vm50, %v46, 0.0
    %52 = vadd.xlane.f32.xlu0 %v51
    %v53 = vpop.xlane.xlu0 %52
    %v54 = vsel %vm50, %v47, 0.0
    %55 = vadd.xlane.f32.xlu0 %v54
    %v56 = vpop.xlane.xlu0 %55
    %v57 = vrcp.pop 32.0
    %v58 = vmul.f32 %v53, %v57
    %v59 = vmul.f32 %v56, %v57
    %v60 = vsub.f32 %v46, %v58
    %v61 = vsub.f32 %v47, %v59
    %v62 = vmul.f32 %v60, %v60
    %v63 = vmul.f32 %v61, %v61
    %v64 = vsel %vm50, %v62, 0.0
    %65 = vadd.xlane.f32.xlu0 %v64
    %v66 = vpop.xlane.xlu0 %65
    %v67 = vsel %vm50, %v63, 0.0
    %68 = vadd.xlane.f32.xlu0 %v67
    %v69 = vpop.xlane.xlu0 %68
    %v70 = vmul.f32 %v66, %v57
    %v71 = vmul.f32 %v69, %v57
    %v72 = vadd.f32 %v70, 1e-05
    %v73 = vadd.f32 %v71, 1e-05
    %v74 = vrsqrt.pop %v72
    %v75 = vrsqrt.pop %v73
    %v76 = vmul.f32 %v60, %v74
    %v77 = vmul.f32 %v61, %v75
    %v79 = vlaneseq
    %v80 = vshrl.u32 %v79, 7
    %v81 = vsub.s32 0, %v80
    %v82 = vrot.slane %v48, %v81
    %v84 = vmul.f32 %v76, %v82
    %v85 = vmul.f32 %v77, %v82
    %v87 = vlaneseq
    %v88 = vshrl.u32 %v87, 7
    %v89 = vsub.s32 0, %v88
    %v90 = vrot.slane %v49, %v89
    %v92 = vadd.f32 %v84, %v90
    %v93 = vadd.f32 %v85, %v90
    %v94 = vpack.c.bf16 %v93, %v92
    %v95 = vld [vmem:[%s3] sm:$0xf]
    %v96 = vld [vmem:[%s3 + $0x4] sm:$0xf]
    %v97 = vld [vmem:[%s3 + $0x8] sm:$0xf]
    %v98 = vld [vmem:[%s3 + $0xc] sm:$0xf]
    %v99 = vld [vmem:[%s4] sm:$0x1]
    %v101 = vlaneseq
    %v102 = vshrl.u32 %v101, 7
    %v103 = vsub.s32 0, %v102
    %v104 = vrot.slane %v99, %v103
    %v110 = vunpack.c.l.b16 %v95
    %v111 = vunpack.c.l.b16 %v96
    %v112 = vunpack.c.l.b16 %v97
    %v113 = vunpack.c.l.b16 %v98
    %v114 = vpack.c.b16 %v111, %v110
    %v115 = vpack.c.b16 %v113, %v112
    %v119 = vsel %vm50, %v94, 0
    %121 = vmatprep.subr.bf16.mxu0 0
    %122 = vmatpush1.bf16.msra.mxu0 0
    %123 = vmatprep.subr.bf16.mxu0 0
    %124 = vmatpush1.bf16.msra.mxu0 0
    %125 = vmatprep.subr.bf16.mxu0 0
    %126 = vmatpush1.bf16.msra.mxu0 0
    %127 = vmatprep.subr.bf16.mxu0 0
    %128 = vmatpush1.bf16.msra.mxu0 0
    %129 = vmatprep.subr.bf16.mxu0 0
    %130 = vmatpush1.bf16.msra.mxu0 0
    %131 = vmatprep.subr.bf16.mxu0 0
    %132 = vmatpush1.bf16.msra.mxu0 0
    %133 = vmatprep.subr.bf16.mxu0 0
    %134 = vmatpush1.bf16.msra.mxu0 %v115
    %135 = vmatprep.subr.bf16.mxu0 0
    %136 = vmatpush1.bf16.msra.mxu0 %v114
    %137 = vmatprep.subr.bf16.mxu0 0
    %138 = vmatpush2.bf16.msra.mxu0 0
    %139 = vmatprep.subr.bf16.mxu0 0
    %140 = vmatpush2.bf16.msra.mxu0 0
    %141 = vmatprep.subr.bf16.mxu0 0
    %142 = vmatpush2.bf16.msra.mxu0 0
    %143 = vmatprep.subr.bf16.mxu0 0
    %144 = vmatpush2.bf16.msra.mxu0 0
    %145 = vmatprep.subr.bf16.mxu0 0
    %146 = vmatpush2.bf16.msra.mxu0 0
    %147 = vmatprep.subr.bf16.mxu0 0
    %148 = vmatpush2.bf16.msra.mxu0 0
    %149 = vmatprep.subr.bf16.mxu0 0
    %150 = vmatpush2.bf16.msra.mxu0 0
    %151 = vmatprep.subr.bf16.mxu0 0
    %152 = vmatpush2.bf16.msra.mxu0 0
    %153 = vmatprep.mubr.bf16.mxu0 0
    %154 = vmatmul.mubr.bf16.gmra.mxu0 %v119
    %v155 = vpop.f32.mrf.mxu0
    %v156 = vadd.f32 %v104, %v155
    %v157 = vpop.f32.mrf.mxu0
    %v158 = vpop.f32.mrf.mxu0
    %v159 = vadd.f32 %v104, %v158
    %v160 = vpop.f32.mrf.mxu0
    %161 = vdwg.mxu0
    %164 = vrot.lane.b32.xlu0 %v156, 120
    %v165 = vpop.permute.xlu0 %164
    %166 = vrot.lane.b32.xlu0 %v159, 120
    %v167 = vpop.permute.xlu0 %166
    %170 = vrot.lane.b32.xlu0 %v156, 112
    %v171 = vpop.permute.xlu0 %170
    %172 = vrot.lane.b32.xlu0 %v159, 112
    %v173 = vpop.permute.xlu0 %172
    %176 = vrot.lane.b32.xlu0 %v156, 104
    %v177 = vpop.permute.xlu0 %176
    %178 = vrot.lane.b32.xlu0 %v159, 104
    %v179 = vpop.permute.xlu0 %178
    %182 = vrot.lane.b32.xlu0 %v156, 96
    %v183 = vpop.permute.xlu0 %182
    %184 = vrot.lane.b32.xlu0 %v159, 96
    %v185 = vpop.permute.xlu0 %184
    %188 = vrot.lane.b32.xlu0 %v156, 88
    %v189 = vpop.permute.xlu0 %188
    %190 = vrot.lane.b32.xlu0 %v159, 88
    %v191 = vpop.permute.xlu0 %190
    %194 = vrot.lane.b32.xlu0 %v156, 80
    %v195 = vpop.permute.xlu0 %194
    %196 = vrot.lane.b32.xlu0 %v159, 80
    %v197 = vpop.permute.xlu0 %196
    %200 = vrot.lane.b32.xlu0 %v156, 72
    %v201 = vpop.permute.xlu0 %200
    %202 = vrot.lane.b32.xlu0 %v159, 72
    %v203 = vpop.permute.xlu0 %202
    %206 = vrot.lane.b32.xlu0 %v156, 64
    %v207 = vpop.permute.xlu0 %206
    %208 = vrot.lane.b32.xlu0 %v159, 64
    %v209 = vpop.permute.xlu0 %208
    %212 = vrot.lane.b32.xlu0 %v156, 56
    %v213 = vpop.permute.xlu0 %212
    %214 = vrot.lane.b32.xlu0 %v159, 56
    %v215 = vpop.permute.xlu0 %214
    %218 = vrot.lane.b32.xlu0 %v156, 48
    %v219 = vpop.permute.xlu0 %218
    %220 = vrot.lane.b32.xlu0 %v159, 48
    %v221 = vpop.permute.xlu0 %220
    %224 = vrot.lane.b32.xlu0 %v156, 40
    %v225 = vpop.permute.xlu0 %224
    %226 = vrot.lane.b32.xlu0 %v159, 40
    %v227 = vpop.permute.xlu0 %226
    %v230 = vcombine.low %v156, %v171
    %v231 = vcombine.high %v156, %v171
    %v233 = vunpack.c.l.s4 1983009808
    %v234 = vunpack.c.0.s8 %v233
    %v235 = vlaneseq
    %v236 = vshrl.u32 %v235, 7
    %v237 = vsub.s32 %v234, %v236
    %v238 = vrot.slane %v230, %v237
    %v240 = vunpack.c.l.s4 1983009808
    %v241 = vunpack.c.0.s8 %v240
    %v242 = vlaneseq
    %v243 = vshrl.u32 %v242, 7
    %v244 = vsub.s32 %v241, %v243
    %v245 = vrot.slane %v231, %v244
    %v246 = vcombine.low %v165, %v177
    %v247 = vcombine.high %v165, %v177
    %v249 = vunpack.c.l.s4 1983009808
    %v250 = vunpack.c.0.s8 %v249
    %v251 = vlaneseq
    %v252 = vshrl.u32 %v251, 7
    %v253 = vsub.s32 %v250, %v252
    %v254 = vrot.slane %v246, %v253
    %v256 = vunpack.c.l.s4 1983009808
    %v257 = vunpack.c.0.s8 %v256
    %v258 = vlaneseq
    %v259 = vshrl.u32 %v258, 7
    %v260 = vsub.s32 %v257, %v259
    %v261 = vrot.slane %v247, %v260
    %v262 = vcombine.low %v183, %v195
    %v263 = vcombine.high %v183, %v195
    %v265 = vunpack.c.l.s4 1983009808
    %v266 = vunpack.c.0.s8 %v265
    %v267 = vlaneseq
    %v268 = vshrl.u32 %v267, 7
    %v269 = vsub.s32 %v266, %v268
    %v270 = vrot.slane %v262, %v269
    %v272 = vunpack.c.l.s4 1983009808
    %v273 = vunpack.c.0.s8 %v272
    %v274 = vlaneseq
    %v275 = vshrl.u32 %v274, 7
    %v276 = vsub.s32 %v273, %v275
    %v277 = vrot.slane %v263, %v276
    %v278 = vcombine.low %v189, %v201
    %v279 = vcombine.high %v189, %v201
    %v281 = vunpack.c.l.s4 1983009808
    %v282 = vunpack.c.0.s8 %v281
    %v283 = vlaneseq
    %v284 = vshrl.u32 %v283, 7
    %v285 = vsub.s32 %v282, %v284
    %v286 = vrot.slane %v278, %v285
    %v288 = vunpack.c.l.s4 1983009808
    %v289 = vunpack.c.0.s8 %v288
    %v290 = vlaneseq
    %v291 = vshrl.u32 %v290, 7
    %v292 = vsub.s32 %v289, %v291
    %v293 = vrot.slane %v279, %v292
    %v294 = vcombine.low %v238, %v254
    %v295 = vcombine.high %v238, %v254
    %v297 = vunpack.c.l.s4 1934713408
    %v298 = vunpack.c.0.s8 %v297
    %v299 = vlaneseq
    %v300 = vshrl.u32 %v299, 7
    %v301 = vsub.s32 %v298, %v300
    %v302 = vrot.slane %v294, %v301
    %v304 = vunpack.c.l.s4 1934713408
    %v305 = vunpack.c.0.s8 %v304
    %v306 = vlaneseq
    %v307 = vshrl.u32 %v306, 7
    %v308 = vsub.s32 %v305, %v307
    %v309 = vrot.slane %v295, %v308
    %v310 = vcombine.low %v245, %v261
    %v311 = vcombine.high %v245, %v261
    %v313 = vunpack.c.l.s4 1934713408
    %v314 = vunpack.c.0.s8 %v313
    %v315 = vlaneseq
    %v316 = vshrl.u32 %v315, 7
    %v317 = vsub.s32 %v314, %v316
    %v318 = vrot.slane %v310, %v317
    %v320 = vunpack.c.l.s4 1934713408
    %v321 = vunpack.c.0.s8 %v320
    %v322 = vlaneseq
    %v323 = vshrl.u32 %v322, 7
    %v324 = vsub.s32 %v321, %v323
    %v325 = vrot.slane %v311, %v324
    %v326 = vcombine.low %v270, %v286
    %v327 = vcombine.high %v270, %v286
    %v329 = vunpack.c.l.s4 1934713408
    %v330 = vunpack.c.0.s8 %v329
    %v331 = vlaneseq
    %v332 = vshrl.u32 %v331, 7
    %v333 = vsub.s32 %v330, %v332
    %v334 = vrot.slane %v326, %v333
    %v336 = vunpack.c.l.s4 1934713408
    %v337 = vunpack.c.0.s8 %v336
    %v338 = vlaneseq
    %v339 = vshrl.u32 %v338, 7
    %v340 = vsub.s32 %v337, %v339
    %v341 = vrot.slane %v327, %v340
    %v342 = vcombine.low %v277, %v293
    %v343 = vcombine.high %v277, %v293
    %v345 = vunpack.c.l.s4 1934713408
    %v346 = vunpack.c.0.s8 %v345
    %v347 = vlaneseq
    %v348 = vshrl.u32 %v347, 7
    %v349 = vsub.s32 %v346, %v348
    %v350 = vrot.slane %v342, %v349
    %v352 = vunpack.c.l.s4 1934713408
    %v353 = vunpack.c.0.s8 %v352
    %v354 = vlaneseq
    %v355 = vshrl.u32 %v354, 7
    %v356 = vsub.s32 %v353, %v355
    %v357 = vrot.slane %v343, %v356
    %v358 = vcombine.low %v302, %v334
    %v359 = vcombine.high %v302, %v334
    %v360 = vcombine.low %v309, %v341
    %v361 = vcombine.high %v309, %v341
    %v362 = vcombine.low %v318, %v350
    %v363 = vcombine.high %v318, %v350
    %v364 = vcombine.low %v325, %v357
    %v365 = vcombine.high %v325, %v357
    %v366 = vcombine.low %v207, %v219
    %v367 = vcombine.high %v207, %v219
    %v369 = vunpack.c.l.s4 1983009808
    %v370 = vunpack.c.0.s8 %v369
    %v371 = vlaneseq
    %v372 = vshrl.u32 %v371, 7
    %v373 = vsub.s32 %v370, %v372
    %v374 = vrot.slane %v366, %v373
    %v376 = vunpack.c.l.s4 1983009808
    %v377 = vunpack.c.0.s8 %v376
    %v378 = vlaneseq
    %v379 = vshrl.u32 %v378, 7
    %v380 = vsub.s32 %v377, %v379
    %v381 = vrot.slane %v367, %v380
    %v382 = vcombine.low %v213, %v225
    %v383 = vcombine.high %v213, %v225
    %v385 = vunpack.c.l.s4 1983009808
    %v386 = vunpack.c.0.s8 %v385
    %v387 = vlaneseq
    %v388 = vshrl.u32 %v387, 7
    %v389 = vsub.s32 %v386, %v388
    %v390 = vrot.slane %v382, %v389
    %v392 = vunpack.c.l.s4 1983009808
    %v393 = vunpack.c.0.s8 %v392
    %v394 = vlaneseq
    %v395 = vshrl.u32 %v394, 7
    %v396 = vsub.s32 %v393, %v395
    %v397 = vrot.slane %v383, %v396
    %v398 = vcombine.low %v374, %v390
    %v399 = vcombine.high %v374, %v390
    %v401 = vunpack.c.l.s4 1934713408
    %v402 = vunpack.c.0.s8 %v401
    %v403 = vlaneseq
    %v404 = vshrl.u32 %v403, 7
    %v405 = vsub.s32 %v402, %v404
    %v406 = vrot.slane %v398, %v405
    %v408 = vunpack.c.l.s4 1934713408
    %v409 = vunpack.c.0.s8 %v408
    %v410 = vlaneseq
    %v411 = vshrl.u32 %v410, 7
    %v412 = vsub.s32 %v409, %v411
    %v413 = vrot.slane %v399, %v412
    %v414 = vcombine.low %v381, %v397
    %v415 = vcombine.high %v381, %v397
    %v417 = vunpack.c.l.s4 1934713408
    %v418 = vunpack.c.0.s8 %v417
    %v419 = vlaneseq
    %v420 = vshrl.u32 %v419, 7
    %v421 = vsub.s32 %v418, %v420
    %v422 = vrot.slane %v414, %v421
    %v424 = vunpack.c.l.s4 1934713408
    %v425 = vunpack.c.0.s8 %v424
    %v426 = vlaneseq
    %v427 = vshrl.u32 %v426, 7
    %v428 = vsub.s32 %v425, %v427
    %v429 = vrot.slane %v415, %v428
    %v430 = vcombine.high %v406, 0.0
    %v431 = vcombine.high %v413, 0.0
    %v432 = vcombine.high %v422, 0.0
    %v433 = vcombine.high %v429, 0.0
    %v434 = vcombine.low %v159, %v173
    %v435 = vcombine.high %v159, %v173
    %v437 = vunpack.c.l.s4 1983009808
    %v438 = vunpack.c.0.s8 %v437
    %v439 = vlaneseq
    %v440 = vshrl.u32 %v439, 7
    %v441 = vsub.s32 %v438, %v440
    %v442 = vrot.slane %v434, %v441
    %v444 = vunpack.c.l.s4 1983009808
    %v445 = vunpack.c.0.s8 %v444
    %v446 = vlaneseq
    %v447 = vshrl.u32 %v446, 7
    %v448 = vsub.s32 %v445, %v447
    %v449 = vrot.slane %v435, %v448
    %v450 = vcombine.low %v167, %v179
    %v451 = vcombine.high %v167, %v179
    %v453 = vunpack.c.l.s4 1983009808
    %v454 = vunpack.c.0.s8 %v453
    %v455 = vlaneseq
    %v456 = vshrl.u32 %v455, 7
    %v457 = vsub.s32 %v454, %v456
    %v458 = vrot.slane %v450, %v457
    %v460 = vunpack.c.l.s4 1983009808
    %v461 = vunpack.c.0.s8 %v460
    %v462 = vlaneseq
    %v463 = vshrl.u32 %v462, 7
    %v464 = vsub.s32 %v461, %v463
    %v465 = vrot.slane %v451, %v464
    %v466 = vcombine.low %v185, %v197
    %v467 = vcombine.high %v185, %v197
    %v469 = vunpack.c.l.s4 1983009808
    %v470 = vunpack.c.0.s8 %v469
    %v471 = vlaneseq
    %v472 = vshrl.u32 %v471, 7
    %v473 = vsub.s32 %v470, %v472
    %v474 = vrot.slane %v466, %v473
    %v476 = vunpack.c.l.s4 1983009808
    %v477 = vunpack.c.0.s8 %v476
    %v478 = vlaneseq
    %v479 = vshrl.u32 %v478, 7
    %v480 = vsub.s32 %v477, %v479
    %v481 = vrot.slane %v467, %v480
    %v482 = vcombine.low %v191, %v203
    %v483 = vcombine.high %v191, %v203
    %v485 = vunpack.c.l.s4 1983009808
    %v486 = vunpack.c.0.s8 %v485
    %v487 = vlaneseq
    %v488 = vshrl.u32 %v487, 7
    %v489 = vsub.s32 %v486, %v488
    %v490 = vrot.slane %v482, %v489
    %v492 = vunpack.c.l.s4 1983009808
    %v493 = vunpack.c.0.s8 %v492
    %v494 = vlaneseq
    %v495 = vshrl.u32 %v494, 7
    %v496 = vsub.s32 %v493, %v495
    %v497 = vrot.slane %v483, %v496
    %v498 = vcombine.low %v442, %v458
    %v499 = vcombine.high %v442, %v458
    %v501 = vunpack.c.l.s4 1934713408
    %v502 = vunpack.c.0.s8 %v501
    %v503 = vlaneseq
    %v504 = vshrl.u32 %v503, 7
    %v505 = vsub.s32 %v502, %v504
    %v506 = vrot.slane %v498, %v505
    %v508 = vunpack.c.l.s4 1934713408
    %v509 = vunpack.c.0.s8 %v508
    %v510 = vlaneseq
    %v511 = vshrl.u32 %v510, 7
    %v512 = vsub.s32 %v509, %v511
    %v513 = vrot.slane %v499, %v512
    %v514 = vcombine.low %v449, %v465
    %v515 = vcombine.high %v449, %v465
    %v517 = vunpack.c.l.s4 1934713408
    %v518 = vunpack.c.0.s8 %v517
    %v519 = vlaneseq
    %v520 = vshrl.u32 %v519, 7
    %v521 = vsub.s32 %v518, %v520
    %v522 = vrot.slane %v514, %v521
    %v524 = vunpack.c.l.s4 1934713408
    %v525 = vunpack.c.0.s8 %v524
    %v526 = vlaneseq
    %v527 = vshrl.u32 %v526, 7
    %v528 = vsub.s32 %v525, %v527
    %v529 = vrot.slane %v515, %v528
    %v530 = vcombine.low %v474, %v490
    %v531 = vcombine.high %v474, %v490
    %v533 = vunpack.c.l.s4 1934713408
    %v534 = vunpack.c.0.s8 %v533
    %v535 = vlaneseq
    %v536 = vshrl.u32 %v535, 7
    %v537 = vsub.s32 %v534, %v536
    %v538 = vrot.slane %v530, %v537
    %v540 = vunpack.c.l.s4 1934713408
    %v541 = vunpack.c.0.s8 %v540
    %v542 = vlaneseq
    %v543 = vshrl.u32 %v542, 7
    %v544 = vsub.s32 %v541, %v543
    %v545 = vrot.slane %v531, %v544
    %v546 = vcombine.low %v481, %v497
    %v547 = vcombine.high %v481, %v497
    %v549 = vunpack.c.l.s4 1934713408
    %v550 = vunpack.c.0.s8 %v549
    %v551 = vlaneseq
    %v552 = vshrl.u32 %v551, 7
    %v553 = vsub.s32 %v550, %v552
    %v554 = vrot.slane %v546, %v553
    %v556 = vunpack.c.l.s4 1934713408
    %v557 = vunpack.c.0.s8 %v556
    %v558 = vlaneseq
    %v559 = vshrl.u32 %v558, 7
    %v560 = vsub.s32 %v557, %v559
    %v561 = vrot.slane %v547, %v560
    %v562 = vcombine.low %v506, %v538
    %v563 = vcombine.high %v506, %v538
    %v564 = vcombine.low %v513, %v545
    %v565 = vcombine.high %v513, %v545
    %v566 = vcombine.low %v522, %v554
    %v567 = vcombine.high %v522, %v554
    %v568 = vcombine.low %v529, %v561
    %v569 = vcombine.high %v529, %v561
    %v570 = vcombine.low %v209, %v221
    %v571 = vcombine.high %v209, %v221
    %v573 = vunpack.c.l.s4 1983009808
    %v574 = vunpack.c.0.s8 %v573
    %v575 = vlaneseq
    %v576 = vshrl.u32 %v575, 7
    %v577 = vsub.s32 %v574, %v576
    %v578 = vrot.slane %v570, %v577
    %v580 = vunpack.c.l.s4 1983009808
    %v581 = vunpack.c.0.s8 %v580
    %v582 = vlaneseq
    %v583 = vshrl.u32 %v582, 7
    %v584 = vsub.s32 %v581, %v583
    %v585 = vrot.slane %v571, %v584
    %v586 = vcombine.low %v215, %v227
    %v587 = vcombine.high %v215, %v227
    %v589 = vunpack.c.l.s4 1983009808
    %v590 = vunpack.c.0.s8 %v589
    %v591 = vlaneseq
    %v592 = vshrl.u32 %v591, 7
    %v593 = vsub.s32 %v590, %v592
    %v594 = vrot.slane %v586, %v593
    %v596 = vunpack.c.l.s4 1983009808
    %v597 = vunpack.c.0.s8 %v596
    %v598 = vlaneseq
    %v599 = vshrl.u32 %v598, 7
    %v600 = vsub.s32 %v597, %v599
    %v601 = vrot.slane %v587, %v600
    %v602 = vcombine.low %v578, %v594
    %v603 = vcombine.high %v578, %v594
    %v605 = vunpack.c.l.s4 1934713408
    %v606 = vunpack.c.0.s8 %v605
    %v607 = vlaneseq
    %v608 = vshrl.u32 %v607, 7
    %v609 = vsub.s32 %v606, %v608
    %v610 = vrot.slane %v602, %v609
    %v612 = vunpack.c.l.s4 1934713408
    %v613 = vunpack.c.0.s8 %v612
    %v614 = vlaneseq
    %v615 = vshrl.u32 %v614, 7
    %v616 = vsub.s32 %v613, %v615
    %v617 = vrot.slane %v603, %v616
    %v618 = vcombine.low %v585, %v601
    %v619 = vcombine.high %v585, %v601
    %v621 = vunpack.c.l.s4 1934713408
    %v622 = vunpack.c.0.s8 %v621
    %v623 = vlaneseq
    %v624 = vshrl.u32 %v623, 7
    %v625 = vsub.s32 %v622, %v624
    %v626 = vrot.slane %v618, %v625
    %v628 = vunpack.c.l.s4 1934713408
    %v629 = vunpack.c.0.s8 %v628
    %v630 = vlaneseq
    %v631 = vshrl.u32 %v630, 7
    %v632 = vsub.s32 %v629, %v631
    %v633 = vrot.slane %v619, %v632
    %v634 = vcombine.high %v610, 0.0
    %v635 = vcombine.high %v617, 0.0
    %v636 = vcombine.high %v626, 0.0
    %v637 = vcombine.high %v633, 0.0
    %v638 = vcombine.low %v358, %v360
    %v639 = vcombine.high %v358, %v360
    %v641 = vunpack.c.l.s4 1983009808
    %v642 = vunpack.c.0.s8 %v641
    %v643 = vlaneseq
    %v644 = vshrl.u32 %v643, 7
    %v645 = vsub.s32 %v642, %v644
    %v646 = vrot.slane %v638, %v645
    %v648 = vunpack.c.l.s4 1983009808
    %v649 = vunpack.c.0.s8 %v648
    %v650 = vlaneseq
    %v651 = vshrl.u32 %v650, 7
    %v652 = vsub.s32 %v649, %v651
    %v653 = vrot.slane %v639, %v652
    %v654 = vcombine.low %v359, %v361
    %v655 = vcombine.high %v359, %v361
    %v657 = vunpack.c.l.s4 1983009808
    %v658 = vunpack.c.0.s8 %v657
    %v659 = vlaneseq
    %v660 = vshrl.u32 %v659, 7
    %v661 = vsub.s32 %v658, %v660
    %v662 = vrot.slane %v654, %v661
    %v664 = vunpack.c.l.s4 1983009808
    %v665 = vunpack.c.0.s8 %v664
    %v666 = vlaneseq
    %v667 = vshrl.u32 %v666, 7
    %v668 = vsub.s32 %v665, %v667
    %v669 = vrot.slane %v655, %v668
    %v670 = vcombine.low %v362, %v364
    %v671 = vcombine.high %v362, %v364
    %v673 = vunpack.c.l.s4 1983009808
    %v674 = vunpack.c.0.s8 %v673
    %v675 = vlaneseq
    %v676 = vshrl.u32 %v675, 7
    %v677 = vsub.s32 %v674, %v676
    %v678 = vrot.slane %v670, %v677
    %v680 = vunpack.c.l.s4 1983009808
    %v681 = vunpack.c.0.s8 %v680
    %v682 = vlaneseq
    %v683 = vshrl.u32 %v682, 7
    %v684 = vsub.s32 %v681, %v683
    %v685 = vrot.slane %v671, %v684
    %v686 = vcombine.low %v363, %v365
    %v687 = vcombine.high %v363, %v365
    %v689 = vunpack.c.l.s4 1983009808
    %v690 = vunpack.c.0.s8 %v689
    %v691 = vlaneseq
    %v692 = vshrl.u32 %v691, 7
    %v693 = vsub.s32 %v690, %v692
    %v694 = vrot.slane %v686, %v693
    %v696 = vunpack.c.l.s4 1983009808
    %v697 = vunpack.c.0.s8 %v696
    %v698 = vlaneseq
    %v699 = vshrl.u32 %v698, 7
    %v700 = vsub.s32 %v697, %v699
    %v701 = vrot.slane %v687, %v700
    %v702 = vcombine.low %v646, %v662
    %v703 = vcombine.high %v646, %v662
    %v705 = vunpack.c.l.s4 1934713408
    %v706 = vunpack.c.0.s8 %v705
    %v707 = vlaneseq
    %v708 = vshrl.u32 %v707, 7
    %v709 = vsub.s32 %v706, %v708
    %v710 = vrot.slane %v702, %v709
    %v712 = vunpack.c.l.s4 1934713408
    %v713 = vunpack.c.0.s8 %v712
    %v714 = vlaneseq
    %v715 = vshrl.u32 %v714, 7
    %v716 = vsub.s32 %v713, %v715
    %v717 = vrot.slane %v703, %v716
    %v718 = vcombine.low %v653, %v669
    %v719 = vcombine.high %v653, %v669
    %v721 = vunpack.c.l.s4 1934713408
    %v722 = vunpack.c.0.s8 %v721
    %v723 = vlaneseq
    %v724 = vshrl.u32 %v723, 7
    %v725 = vsub.s32 %v722, %v724
    %v726 = vrot.slane %v718, %v725
    %v728 = vunpack.c.l.s4 1934713408
    %v729 = vunpack.c.0.s8 %v728
    %v730 = vlaneseq
    %v731 = vshrl.u32 %v730, 7
    %v732 = vsub.s32 %v729, %v731
    %v733 = vrot.slane %v719, %v732
    %v734 = vcombine.low %v678, %v694
    %v735 = vcombine.high %v678, %v694
    %v737 = vunpack.c.l.s4 1934713408
    %v738 = vunpack.c.0.s8 %v737
    %v739 = vlaneseq
    %v740 = vshrl.u32 %v739, 7
    %v741 = vsub.s32 %v738, %v740
    %v742 = vrot.slane %v734, %v741
    %v744 = vunpack.c.l.s4 1934713408
    %v745 = vunpack.c.0.s8 %v744
    %v746 = vlaneseq
    %v747 = vshrl.u32 %v746, 7
    %v748 = vsub.s32 %v745, %v747
    %v749 = vrot.slane %v735, %v748
    %v750 = vcombine.low %v685, %v701
    %v751 = vcombine.high %v685, %v701
    %v753 = vunpack.c.l.s4 1934713408
    %v754 = vunpack.c.0.s8 %v753
    %v755 = vlaneseq
    %v756 = vshrl.u32 %v755, 7
    %v757 = vsub.s32 %v754, %v756
    %v758 = vrot.slane %v750, %v757
    %v760 = vunpack.c.l.s4 1934713408
    %v761 = vunpack.c.0.s8 %v760
    %v762 = vlaneseq
    %v763 = vshrl.u32 %v762, 7
    %v764 = vsub.s32 %v761, %v763
    %v765 = vrot.slane %v751, %v764
    %v766 = vcombine.low %v710, %v742
    %v767 = vcombine.high %v710, %v742
    %v768 = vcombine.low %v717, %v749
    %v769 = vcombine.high %v717, %v749
    %v770 = vcombine.low %v726, %v758
    %v771 = vcombine.high %v726, %v758
    %v772 = vcombine.low %v733, %v765
    %v773 = vcombine.high %v733, %v765
    %v774 = vcombine.low %v562, %v564
    %v775 = vcombine.high %v562, %v564
    %v777 = vunpack.c.l.s4 1983009808
    %v778 = vunpack.c.0.s8 %v777
    %v779 = vlaneseq
    %v780 = vshrl.u32 %v779, 7
    %v781 = vsub.s32 %v778, %v780
    %v782 = vrot.slane %v774, %v781
    %v784 = vunpack.c.l.s4 1983009808
    %v785 = vunpack.c.0.s8 %v784
    %v786 = vlaneseq
    %v787 = vshrl.u32 %v786, 7
    %v788 = vsub.s32 %v785, %v787
    %v789 = vrot.slane %v775, %v788
    %v790 = vcombine.low %v563, %v565
    %v791 = vcombine.high %v563, %v565
    %v793 = vunpack.c.l.s4 1983009808
    %v794 = vunpack.c.0.s8 %v793
    %v795 = vlaneseq
    %v796 = vshrl.u32 %v795, 7
    %v797 = vsub.s32 %v794, %v796
    %v798 = vrot.slane %v790, %v797
    %v800 = vunpack.c.l.s4 1983009808
    %v801 = vunpack.c.0.s8 %v800
    %v802 = vlaneseq
    %v803 = vshrl.u32 %v802, 7
    %v804 = vsub.s32 %v801, %v803
    %v805 = vrot.slane %v791, %v804
    %v806 = vcombine.low %v566, %v568
    %v807 = vcombine.high %v566, %v568
    %v809 = vunpack.c.l.s4 1983009808
    %v810 = vunpack.c.0.s8 %v809
    %v811 = vlaneseq
    %v812 = vshrl.u32 %v811, 7
    %v813 = vsub.s32 %v810, %v812
    %v814 = vrot.slane %v806, %v813
    %v816 = vunpack.c.l.s4 1983009808
    %v817 = vunpack.c.0.s8 %v816
    %v818 = vlaneseq
    %v819 = vshrl.u32 %v818, 7
    %v820 = vsub.s32 %v817, %v819
    %v821 = vrot.slane %v807, %v820
    %v822 = vcombine.low %v567, %v569
    %v823 = vcombine.high %v567, %v569
    %v825 = vunpack.c.l.s4 1983009808
    %v826 = vunpack.c.0.s8 %v825
    %v827 = vlaneseq
    %v828 = vshrl.u32 %v827, 7
    %v829 = vsub.s32 %v826, %v828
    %v830 = vrot.slane %v822, %v829
    %v832 = vunpack.c.l.s4 1983009808
    %v833 = vunpack.c.0.s8 %v832
    %v834 = vlaneseq
    %v835 = vshrl.u32 %v834, 7
    %v836 = vsub.s32 %v833, %v835
    %v837 = vrot.slane %v823, %v836
    %v838 = vcombine.low %v782, %v798
    %v839 = vcombine.high %v782, %v798
    %v841 = vunpack.c.l.s4 1934713408
    %v842 = vunpack.c.0.s8 %v841
    %v843 = vlaneseq
    %v844 = vshrl.u32 %v843, 7
    %v845 = vsub.s32 %v842, %v844
    %v846 = vrot.slane %v838, %v845
    %v848 = vunpack.c.l.s4 1934713408
    %v849 = vunpack.c.0.s8 %v848
    %v850 = vlaneseq
    %v851 = vshrl.u32 %v850, 7
    %v852 = vsub.s32 %v849, %v851
    %v853 = vrot.slane %v839, %v852
    %v854 = vcombine.low %v789, %v805
    %v855 = vcombine.high %v789, %v805
    %v857 = vunpack.c.l.s4 1934713408
    %v858 = vunpack.c.0.s8 %v857
    %v859 = vlaneseq
    %v860 = vshrl.u32 %v859, 7
    %v861 = vsub.s32 %v858, %v860
    %v862 = vrot.slane %v854, %v861
    %v864 = vunpack.c.l.s4 1934713408
    %v865 = vunpack.c.0.s8 %v864
    %v866 = vlaneseq
    %v867 = vshrl.u32 %v866, 7
    %v868 = vsub.s32 %v865, %v867
    %v869 = vrot.slane %v855, %v868
    %v870 = vcombine.low %v814, %v830
    %v871 = vcombine.high %v814, %v830
    %v873 = vunpack.c.l.s4 1934713408
    %v874 = vunpack.c.0.s8 %v873
    %v875 = vlaneseq
    %v876 = vshrl.u32 %v875, 7
    %v877 = vsub.s32 %v874, %v876
    %v878 = vrot.slane %v870, %v877
    %v880 = vunpack.c.l.s4 1934713408
    %v881 = vunpack.c.0.s8 %v880
    %v882 = vlaneseq
    %v883 = vshrl.u32 %v882, 7
    %v884 = vsub.s32 %v881, %v883
    %v885 = vrot.slane %v871, %v884
    %v886 = vcombine.low %v821, %v837
    %v887 = vcombine.high %v821, %v837
    %v889 = vunpack.c.l.s4 1934713408
    %v890 = vunpack.c.0.s8 %v889
    %v891 = vlaneseq
    %v892 = vshrl.u32 %v891, 7
    %v893 = vsub.s32 %v890, %v892
    %v894 = vrot.slane %v886, %v893
    %v896 = vunpack.c.l.s4 1934713408
    %v897 = vunpack.c.0.s8 %v896
    %v898 = vlaneseq
    %v899 = vshrl.u32 %v898, 7
    %v900 = vsub.s32 %v897, %v899
    %v901 = vrot.slane %v887, %v900
    %v902 = vcombine.low %v846, %v878
    %v903 = vcombine.high %v846, %v878
    %v904 = vcombine.low %v853, %v885
    %v905 = vcombine.high %v853, %v885
    %v906 = vcombine.low %v862, %v894
    %v907 = vcombine.high %v862, %v894
    %v908 = vcombine.low %v869, %v901
    %v909 = vcombine.high %v869, %v901
    %v910 = vcombine.low %v406, %v413
    %v912 = vunpack.c.l.s4 1983009808
    %v913 = vunpack.c.0.s8 %v912
    %v914 = vlaneseq
    %v915 = vshrl.u32 %v914, 7
    %v916 = vsub.s32 %v913, %v915
    %v917 = vrot.slane %v910, %v916
    %v918 = vcombine.low %v430, %v431
    %v920 = vunpack.c.l.s4 1983009808
    %v921 = vunpack.c.0.s8 %v920
    %v922 = vlaneseq
    %v923 = vshrl.u32 %v922, 7
    %v924 = vsub.s32 %v921, %v923
    %v925 = vrot.slane %v918, %v924
    %v926 = vcombine.low %v422, %v429
    %v928 = vunpack.c.l.s4 1983009808
    %v929 = vunpack.c.0.s8 %v928
    %v930 = vlaneseq
    %v931 = vshrl.u32 %v930, 7
    %v932 = vsub.s32 %v929, %v931
    %v933 = vrot.slane %v926, %v932
    %v934 = vcombine.low %v432, %v433
    %v936 = vunpack.c.l.s4 1983009808
    %v937 = vunpack.c.0.s8 %v936
    %v938 = vlaneseq
    %v939 = vshrl.u32 %v938, 7
    %v940 = vsub.s32 %v937, %v939
    %v941 = vrot.slane %v934, %v940
    %v942 = vcombine.low %v917, %v925
    %v943 = vcombine.high %v917, %v925
    %v945 = vunpack.c.l.s4 1934713408
    %v946 = vunpack.c.0.s8 %v945
    %v947 = vlaneseq
    %v948 = vshrl.u32 %v947, 7
    %v949 = vsub.s32 %v946, %v948
    %v950 = vrot.slane %v942, %v949
    %v952 = vunpack.c.l.s4 1934713408
    %v953 = vunpack.c.0.s8 %v952
    %v954 = vlaneseq
    %v955 = vshrl.u32 %v954, 7
    %v956 = vsub.s32 %v953, %v955
    %v957 = vrot.slane %v943, %v956
    %v958 = vcombine.low %v933, %v941
    %v959 = vcombine.high %v933, %v941
    %v961 = vunpack.c.l.s4 1934713408
    %v962 = vunpack.c.0.s8 %v961
    %v963 = vlaneseq
    %v964 = vshrl.u32 %v963, 7
    %v965 = vsub.s32 %v962, %v964
    %v966 = vrot.slane %v958, %v965
    %v968 = vunpack.c.l.s4 1934713408
    %v969 = vunpack.c.0.s8 %v968
    %v970 = vlaneseq
    %v971 = vshrl.u32 %v970, 7
    %v972 = vsub.s32 %v969, %v971
    %v973 = vrot.slane %v959, %v972
    %v974 = vcombine.low %v950, %v966
    %v975 = vcombine.high %v950, %v966
    %v976 = vcombine.low %v957, %v973
    %v977 = vcombine.high %v957, %v973
    %v978 = vcombine.low %v610, %v617
    %v980 = vunpack.c.l.s4 1983009808
    %v981 = vunpack.c.0.s8 %v980
    %v982 = vlaneseq
    %v983 = vshrl.u32 %v982, 7
    %v984 = vsub.s32 %v981, %v983
    %v985 = vrot.slane %v978, %v984
    %v986 = vcombine.low %v634, %v635
    %v988 = vunpack.c.l.s4 1983009808
    %v989 = vunpack.c.0.s8 %v988
    %v990 = vlaneseq
    %v991 = vshrl.u32 %v990, 7
    %v992 = vsub.s32 %v989, %v991
    %v993 = vrot.slane %v986, %v992
    %v994 = vcombine.low %v626, %v633
    %v996 = vunpack.c.l.s4 1983009808
    %v997 = vunpack.c.0.s8 %v996
    %v998 = vlaneseq
    %v999 = vshrl.u32 %v998, 7
    %v1000 = vsub.s32 %v997, %v999
    %v1001 = vrot.slane %v994, %v1000
    %v1002 = vcombine.low %v636, %v637
    %v1004 = vunpack.c.l.s4 1983009808
    %v1005 = vunpack.c.0.s8 %v1004
    %v1006 = vlaneseq
    %v1007 = vshrl.u32 %v1006, 7
    %v1008 = vsub.s32 %v1005, %v1007
    %v1009 = vrot.slane %v1002, %v1008
    %v1010 = vcombine.low %v985, %v993
    %v1011 = vcombine.high %v985, %v993
    %v1013 = vunpack.c.l.s4 1934713408
    %v1014 = vunpack.c.0.s8 %v1013
    %v1015 = vlaneseq
    %v1016 = vshrl.u32 %v1015, 7
    %v1017 = vsub.s32 %v1014, %v1016
    %v1018 = vrot.slane %v1010, %v1017
    %v1020 = vunpack.c.l.s4 1934713408
    %v1021 = vunpack.c.0.s8 %v1020
    %v1022 = vlaneseq
    %v1023 = vshrl.u32 %v1022, 7
    %v1024 = vsub.s32 %v1021, %v1023
    %v1025 = vrot.slane %v1011, %v1024
    %v1026 = vcombine.low %v1001, %v1009
    %v1027 = vcombine.high %v1001, %v1009
    %v1029 = vunpack.c.l.s4 1934713408
    %v1030 = vunpack.c.0.s8 %v1029
    %v1031 = vlaneseq
    %v1032 = vshrl.u32 %v1031, 7
    %v1033 = vsub.s32 %v1030, %v1032
    %v1034 = vrot.slane %v1026, %v1033
    %v1036 = vunpack.c.l.s4 1934713408
    %v1037 = vunpack.c.0.s8 %v1036
    %v1038 = vlaneseq
    %v1039 = vshrl.u32 %v1038, 7
    %v1040 = vsub.s32 %v1037, %v1039
    %v1041 = vrot.slane %v1027, %v1040
    %v1042 = vcombine.low %v1018, %v1034
    %v1043 = vcombine.high %v1018, %v1034
    %v1044 = vcombine.low %v1025, %v1041
    %v1045 = vcombine.high %v1025, %v1041
    %v1046 = vpack.c.bf16 %v902, %v766
    %v1047 = vpack.c.bf16 %v903, %v767
    %v1048 = vpack.c.bf16 %v904, %v768
    %v1049 = vpack.c.bf16 %v905, %v769
    %v1050 = vpack.c.bf16 %v906, %v770
    %v1051 = vpack.c.bf16 %v907, %v771
    %v1052 = vpack.c.bf16 %v908, %v772
    %v1053 = vpack.c.bf16 %v909, %v773
    %v1054 = vpack.c.bf16 %v1042, %v974
    %v1055 = vpack.c.bf16 %v1043, %v975
    %v1056 = vpack.c.bf16 %v1044, %v976
    %v1057 = vpack.c.bf16 %v1045, %v977
    %vm1058 = vcmask 64512
    %v1060 = vsel %vm1058, %v1046, 0
    %v1063 = vsel %vm1058, %v1050, 0
    %1065 = vmatprep.subr.bf16.mxu0 0
    %1066 = vmatpush1.bf16.xpose.msra.mxu0 0
    %1067 = vmatprep.subr.bf16.mxu0 0
    %1068 = vmatpush1.bf16.xpose.msra.mxu0 0
    %1069 = vmatprep.subr.bf16.mxu0 0
    %1070 = vmatpush1.bf16.xpose.msra.mxu0 0
    %1071 = vmatprep.subr.bf16.mxu0 0
    %1072 = vmatpush1.bf16.xpose.msra.mxu0 0
    %1073 = vmatprep.subr.bf16.mxu0 0
    %1074 = vmatpush1.bf16.xpose.msra.mxu0 0
    %1075 = vmatprep.subr.bf16.mxu0 0
    %1076 = vmatpush1.bf16.xpose.msra.mxu0 0
    %1077 = vmatprep.subr.bf16.mxu0 0
    %1078 = vmatpush1.bf16.xpose.msra.mxu0 0
    %1079 = vmatprep.subr.bf16.mxu0 0
    %1080 = vmatpush1.bf16.xpose.msra.mxu0 %v1063
    %1081 = vmatprep.subr.bf16.mxu0 0
    %1082 = vmatpush2.bf16.xpose.msra.mxu0 0
    %1083 = vmatprep.subr.bf16.mxu0 0
    %1084 = vmatpush2.bf16.xpose.msra.mxu0 0
    %1085 = vmatprep.subr.bf16.mxu0 0
    %1086 = vmatpush2.bf16.xpose.msra.mxu0 0
    %1087 = vmatprep.subr.bf16.mxu0 0
    %1088 = vmatpush2.bf16.xpose.msra.mxu0 0
    %1089 = vmatprep.subr.bf16.mxu0 0
    %1090 = vmatpush2.bf16.xpose.msra.mxu0 0
    %1091 = vmatprep.subr.bf16.mxu0 0
    %1092 = vmatpush2.bf16.xpose.msra.mxu0 0
    %1093 = vmatprep.subr.bf16.mxu0 0
    %1094 = vmatpush2.bf16.xpose.msra.mxu0 0
    %1095 = vmatprep.subr.bf16.mxu0 0
    %1096 = vmatpush2.bf16.xpose.msra.mxu0 0
    %1097 = vmatprep.mubr.bf16.mxu0 0
    %1098 = vmatmul.mubr.bf16.gmra.mxu0 %v1060
    %v1099 = vpop.f32.mrf.mxu0
    %v1100 = vadd.f32 0.0, %v1099
    %v1101 = vpop.f32.mrf.mxu0
    %v1102 = vpop.f32.mrf.mxu0
    %v1103 = vadd.f32 0.0, %v1102
    %v1104 = vpop.f32.mrf.mxu0
    %1105 = vdwg.mxu0
    %v1107 = vsel %vm1058, %v1047, 0
    %v1110 = vsel %vm1058, %v1051, 0
    %1112 = vmatprep.subr.bf16.mxu0 0
    %1113 = vmatpush1.bf16.xpose.msra.mxu0 0
    %1114 = vmatprep.subr.bf16.mxu0 0
    %1115 = vmatpush1.bf16.xpose.msra.mxu0 0
    %1116 = vmatprep.subr.bf16.mxu0 0
    %1117 = vmatpush1.bf16.xpose.msra.mxu0 0
    %1118 = vmatprep.subr.bf16.mxu0 0
    %1119 = vmatpush1.bf16.xpose.msra.mxu0 0
    %1120 = vmatprep.subr.bf16.mxu0 0
    %1121 = vmatpush1.bf16.xpose.msra.mxu0 0
    %1122 = vmatprep.subr.bf16.mxu0 0
    %1123 = vmatpush1.bf16.xpose.msra.mxu0 0
    %1124 = vmatprep.subr.bf16.mxu0 0
    %1125 = vmatpush1.bf16.xpose.msra.mxu0 0
    %1126 = vmatprep.subr.bf16.mxu0 0
    %1127 = vmatpush1.bf16.xpose.msra.mxu0 %v1110
    %1128 = vmatprep.subr.bf16.mxu0 0
    %1129 = vmatpush2.bf16.xpose.msra.mxu0 0
    %1130 = vmatprep.subr.bf16.mxu0 0
    %1131 = vmatpush2.bf16.xpose.msra.mxu0 0
    %1132 = vmatprep.subr.bf16.mxu0 0
    %1133 = vmatpush2.bf16.xpose.msra.mxu0 0
    %1134 = vmatprep.subr.bf16.mxu0 0
    %1135 = vmatpush2.bf16.xpose.msra.mxu0 0
    %1136 = vmatprep.subr.bf16.mxu0 0
    %1137 = vmatpush2.bf16.xpose.msra.mxu0 0
    %1138 = vmatprep.subr.bf16.mxu0 0
    %1139 = vmatpush2.bf16.xpose.msra.mxu0 0
    %1140 = vmatprep.subr.bf16.mxu0 0
    %1141 = vmatpush2.bf16.xpose.msra.mxu0 0
    %1142 = vmatprep.subr.bf16.mxu0 0
    %1143 = vmatpush2.bf16.xpose.msra.mxu0 0
    %1144 = vmatprep.mubr.bf16.mxu0 0
    %1145 = vmatmul.mubr.bf16.gmra.mxu0 %v1107
    %v1146 = vpop.f32.mrf.mxu0
    %v1147 = vadd.f32 0.0, %v1146
    %v1148 = vpop.f32.mrf.mxu0
    %v1149 = vpop.f32.mrf.mxu0
    %v1150 = vadd.f32 0.0, %v1149
    %v1151 = vpop.f32.mrf.mxu0
    %1152 = vdwg.mxu0
    %v1154 = vsel %vm1058, %v1048, 0
    %v1157 = vsel %vm1058, %v1052, 0
    %1159 = vmatprep.subr.bf16.mxu0 0
    %1160 = vmatpush1.bf16.xpose.msra.mxu0 0
    %1161 = vmatprep.subr.bf16.mxu0 0
    %1162 = vmatpush1.bf16.xpose.msra.mxu0 0
    %1163 = vmatprep.subr.bf16.mxu0 0
    %1164 = vmatpush1.bf16.xpose.msra.mxu0 0
    %1165 = vmatprep.subr.bf16.mxu0 0
    %1166 = vmatpush1.bf16.xpose.msra.mxu0 0
    %1167 = vmatprep.subr.bf16.mxu0 0
    %1168 = vmatpush1.bf16.xpose.msra.mxu0 0
    %1169 = vmatprep.subr.bf16.mxu0 0
    %1170 = vmatpush1.bf16.xpose.msra.mxu0 0
    %1171 = vmatprep.subr.bf16.mxu0 0
    %1172 = vmatpush1.bf16.xpose.msra.mxu0 0
    %1173 = vmatprep.subr.bf16.mxu0 0
    %1174 = vmatpush1.bf16.xpose.msra.mxu0 %v1157
    %1175 = vmatprep.subr.bf16.mxu0 0
    %1176 = vmatpush2.bf16.xpose.msra.mxu0 0
    %1177 = vmatprep.subr.bf16.mxu0 0
    %1178 = vmatpush2.bf16.xpose.msra.mxu0 0
    %1179 = vmatprep.subr.bf16.mxu0 0
    %1180 = vmatpush2.bf16.xpose.msra.mxu0 0
    %1181 = vmatprep.subr.bf16.mxu0 0
    %1182 = vmatpush2.bf16.xpose.msra.mxu0 0
    %1183 = vmatprep.subr.bf16.mxu0 0
    %1184 = vmatpush2.bf16.xpose.msra.mxu0 0
    %1185 = vmatprep.subr.bf16.mxu0 0
    %1186 = vmatpush2.bf16.xpose.msra.mxu0 0
    %1187 = vmatprep.subr.bf16.mxu0 0
    %1188 = vmatpush2.bf16.xpose.msra.mxu0 0
    %1189 = vmatprep.subr.bf16.mxu0 0
    %1190 = vmatpush2.bf16.xpose.msra.mxu0 0
    %1191 = vmatprep.mubr.bf16.mxu0 0
    %1192 = vmatmul.mubr.bf16.gmra.mxu0 %v1154
    %v1193 = vpop.f32.mrf.mxu0
    %v1194 = vadd.f32 0.0, %v1193
    %v1195 = vpop.f32.mrf.mxu0
    %v1196 = vpop.f32.mrf.mxu0
    %v1197 = vadd.f32 0.0, %v1196
    %v1198 = vpop.f32.mrf.mxu0
    %1199 = vdwg.mxu0
    %v1201 = vsel %vm1058, %v1049, 0
    %v1204 = vsel %vm1058, %v1053, 0
    %1206 = vmatprep.subr.bf16.mxu0 0
    %1207 = vmatpush1.bf16.xpose.msra.mxu0 0
    %1208 = vmatprep.subr.bf16.mxu0 0
    %1209 = vmatpush1.bf16.xpose.msra.mxu0 0
    %1210 = vmatprep.subr.bf16.mxu0 0
    %1211 = vmatpush1.bf16.xpose.msra.mxu0 0
    %1212 = vmatprep.subr.bf16.mxu0 0
    %1213 = vmatpush1.bf16.xpose.msra.mxu0 0
    %1214 = vmatprep.subr.bf16.mxu0 0
    %1215 = vmatpush1.bf16.xpose.msra.mxu0 0
    %1216 = vmatprep.subr.bf16.mxu0 0
    %1217 = vmatpush1.bf16.xpose.msra.mxu0 0
    %1218 = vmatprep.subr.bf16.mxu0 0
    %1219 = vmatpush1.bf16.xpose.msra.mxu0 0
    %1220 = vmatprep.subr.bf16.mxu0 0
    %1221 = vmatpush1.bf16.xpose.msra.mxu0 %v1204
    %1222 = vmatprep.subr.bf16.mxu0 0
    %1223 = vmatpush2.bf16.xpose.msra.mxu0 0
    %1224 = vmatprep.subr.bf16.mxu0 0
    %1225 = vmatpush2.bf16.xpose.msra.mxu0 0
    %1226 = vmatprep.subr.bf16.mxu0 0
    %1227 = vmatpush2.bf16.xpose.msra.mxu0 0
    %1228 = vmatprep.subr.bf16.mxu0 0
    %1229 = vmatpush2.bf16.xpose.msra.mxu0 0
    %1230 = vmatprep.subr.bf16.mxu0 0
    %1231 = vmatpush2.bf16.xpose.msra.mxu0 0
    %1232 = vmatprep.subr.bf16.mxu0 0
    %1233 = vmatpush2.bf16.xpose.msra.mxu0 0
    %1234 = vmatprep.subr.bf16.mxu0 0
    %1235 = vmatpush2.bf16.xpose.msra.mxu0 0
    %1236 = vmatprep.subr.bf16.mxu0 0
    %1237 = vmatpush2.bf16.xpose.msra.mxu0 0
    %1238 = vmatprep.mubr.bf16.mxu0 0
    %1239 = vmatmul.mubr.bf16.gmra.mxu0 %v1201
    %v1240 = vpop.f32.mrf.mxu0
    %v1241 = vadd.f32 0.0, %v1240
    %v1242 = vpop.f32.mrf.mxu0
    %v1243 = vpop.f32.mrf.mxu0
    %v1244 = vadd.f32 0.0, %v1243
    %v1245 = vpop.f32.mrf.mxu0
    %1246 = vdwg.mxu0
    %v1247 = vlaneseq
    %v1248 = vshrl.u32 %v1247, 7
    %v1249 = vadd.s32 %v1248, 8
    %v1250 = vlaneseq
    %v1251 = vand.u32 %v1250, 127
    %v1252 = vshra.s32 %v1248, 3
    %v1253 = vshra.s32 %v1249, 3
    %v1254 = vshra.s32 %v1251, 3
    %vm1255 = vcmp.eq.s32.totalorder %v1252, %v1254
    %vm1256 = vcmp.eq.s32.totalorder %v1253, %v1254
    %vm1257 = vcmp.ge.s32.totalorder %v1248, %v1251
    %vm1258 = vcmp.ge.s32.totalorder %v1249, %v1251
    %vm1259 = vmand %vm1255, %vm1257
    %vm1260 = vmand %vm1256, %vm1258
    %v1261 = vsel %vm1259, 1, 0
    %v1262 = vsel %vm1260, 1, 0
    %vm1263 = vcmp.eq.s32.totalorder %v1261, 1
    %vm1264 = vcmp.eq.s32.totalorder %v1262, 1
    %v1265 = vsel %vm1263, %v1100, -1e+30
    %v1266 = vsel %vm1264, %v1103, -1e+30
    %v1267 = vsel %vm1263, %v1147, -1e+30
    %v1268 = vsel %vm1264, %v1150, -1e+30
    %v1269 = vsel %vm1263, %v1194, -1e+30
    %v1270 = vsel %vm1264, %v1197, -1e+30
    %v1271 = vsel %vm1263, %v1241, -1e+30
    %v1272 = vsel %vm1264, %v1244, -1e+30
    %vm1273 = vcmask 130048
    %v1274 = vsel %vm1273, %v1265, -inf
    %1275 = vmax.xlane.f32.xlu0 %v1274
    %v1276 = vpop.xlane.xlu0 %1275
    %v1277 = vsel %vm1273, %v1266, -inf
    %1278 = vmax.xlane.f32.xlu0 %v1277
    %v1279 = vpop.xlane.xlu0 %1278
    %v1280 = vsel %vm1273, %v1267, -inf
    %1281 = vmax.xlane.f32.xlu0 %v1280
    %v1282 = vpop.xlane.xlu0 %1281
    %v1283 = vsel %vm1273, %v1268, -inf
    %1284 = vmax.xlane.f32.xlu0 %v1283
    %v1285 = vpop.xlane.xlu0 %1284
    %v1286 = vsel %vm1273, %v1269, -inf
    %1287 = vmax.xlane.f32.xlu0 %v1286
    %v1288 = vpop.xlane.xlu0 %1287
    %v1289 = vsel %vm1273, %v1270, -inf
    %1290 = vmax.xlane.f32.xlu0 %v1289
    %v1291 = vpop.xlane.xlu0 %1290
    %v1292 = vsel %vm1273, %v1271, -inf
    %1293 = vmax.xlane.f32.xlu0 %v1292
    %v1294 = vpop.xlane.xlu0 %1293
    %v1295 = vsel %vm1273, %v1272, -inf
    %1296 = vmax.xlane.f32.xlu0 %v1295
    %v1297 = vpop.xlane.xlu0 %1296
    %v1298 = vsub.f32 %v1265, %v1276
    %v1299 = vsub.f32 %v1266, %v1279
    %v1300 = vsub.f32 %v1267, %v1282
    %v1301 = vsub.f32 %v1268, %v1285
    %v1302 = vsub.f32 %v1269, %v1288
    %v1303 = vsub.f32 %v1270, %v1291
    %v1304 = vsub.f32 %v1271, %v1294
    %v1305 = vsub.f32 %v1272, %v1297
    %v1306 = vmul.f32 %v1298, 1.442695
    %v1307 = vpow.pop %v1306
    %v1308 = vmul.f32 %v1299, 1.442695
    %v1309 = vpow.pop %v1308
    %v1310 = vmul.f32 %v1300, 1.442695
    %v1311 = vpow.pop %v1310
    %v1312 = vmul.f32 %v1301, 1.442695
    %v1313 = vpow.pop %v1312
    %v1314 = vmul.f32 %v1302, 1.442695
    %v1315 = vpow.pop %v1314
    %v1316 = vmul.f32 %v1303, 1.442695
    %v1317 = vpow.pop %v1316
    %v1318 = vmul.f32 %v1304, 1.442695
    %v1319 = vpow.pop %v1318
    %v1320 = vmul.f32 %v1305, 1.442695
    %v1321 = vpow.pop %v1320
    %v1322 = vsel %vm1273, %v1307, 0.0
    %1323 = vadd.xlane.f32.xlu0 %v1322
    %v1324 = vpop.xlane.xlu0 %1323
    %v1325 = vsel %vm1273, %v1309, 0.0
    %1326 = vadd.xlane.f32.xlu0 %v1325
    %v1327 = vpop.xlane.xlu0 %1326
    %v1328 = vsel %vm1273, %v1311, 0.0
    %1329 = vadd.xlane.f32.xlu0 %v1328
    %v1330 = vpop.xlane.xlu0 %1329
    %v1331 = vsel %vm1273, %v1313, 0.0
    %1332 = vadd.xlane.f32.xlu0 %v1331
    %v1333 = vpop.xlane.xlu0 %1332
    %v1334 = vsel %vm1273, %v1315, 0.0
    %1335 = vadd.xlane.f32.xlu0 %v1334
    %v1336 = vpop.xlane.xlu0 %1335
    %v1337 = vsel %vm1273, %v1317, 0.0
    %1338 = vadd.xlane.f32.xlu0 %v1337
    %v1339 = vpop.xlane.xlu0 %1338
    %v1340 = vsel %vm1273, %v1319, 0.0
    %1341 = vadd.xlane.f32.xlu0 %v1340
    %v1342 = vpop.xlane.xlu0 %1341
    %v1343 = vsel %vm1273, %v1321, 0.0
    %1344 = vadd.xlane.f32.xlu0 %v1343
    %v1345 = vpop.xlane.xlu0 %1344
    %v1346 = vrcp.pop %v1324
    %v1347 = vrcp.pop %v1327
    %v1348 = vrcp.pop %v1330
    %v1349 = vrcp.pop %v1333
    %v1350 = vrcp.pop %v1336
    %v1351 = vrcp.pop %v1339
    %v1352 = vrcp.pop %v1342
    %v1353 = vrcp.pop %v1345
    %v1354 = vmul.f32 %v1307, %v1346
    %v1355 = vmul.f32 %v1309, %v1347
    %v1356 = vmul.f32 %v1311, %v1348
    %v1357 = vmul.f32 %v1313, %v1349
    %v1358 = vmul.f32 %v1315, %v1350
    %v1359 = vmul.f32 %v1317, %v1351
    %v1360 = vmul.f32 %v1319, %v1352
    %v1361 = vmul.f32 %v1321, %v1353
    %v1362 = vpack.c.bf16 %v1355, %v1354
    %v1363 = vpack.c.bf16 %v1357, %v1356
    %v1364 = vpack.c.bf16 %v1359, %v1358
    %v1365 = vpack.c.bf16 %v1361, %v1360
    %v1367 = vsel %vm1273, %v1362, 0
    %1369 = vmatprep.subr.bf16.mxu0 0
    %1370 = vmatpush1.bf16.msra.mxu0 0
    %1371 = vmatprep.subr.bf16.mxu0 0
    %1372 = vmatpush1.bf16.msra.mxu0 0
    %1373 = vmatprep.subr.bf16.mxu0 0
    %1374 = vmatpush1.bf16.msra.mxu0 0
    %1375 = vmatprep.subr.bf16.mxu0 0
    %1376 = vmatpush1.bf16.msra.mxu0 0
    %1377 = vmatprep.subr.bf16.mxu0 0
    %1378 = vmatpush1.bf16.msra.mxu0 0
    %1379 = vmatprep.subr.bf16.mxu0 0
    %1380 = vmatpush1.bf16.msra.mxu0 0
    %1381 = vmatprep.subr.bf16.mxu0 0
    %1382 = vmatpush1.bf16.msra.mxu0 0
    %1383 = vmatprep.subr.bf16.mxu0 0
    %1384 = vmatpush1.bf16.msra.mxu0 %v1054
    %1385 = vmatprep.subr.bf16.mxu0 0
    %1386 = vmatpush2.bf16.msra.mxu0 0
    %1387 = vmatprep.subr.bf16.mxu0 0
    %1388 = vmatpush2.bf16.msra.mxu0 0
    %1389 = vmatprep.subr.bf16.mxu0 0
    %1390 = vmatpush2.bf16.msra.mxu0 0
    %1391 = vmatprep.subr.bf16.mxu0 0
    %1392 = vmatpush2.bf16.msra.mxu0 0
    %1393 = vmatprep.subr.bf16.mxu0 0
    %1394 = vmatpush2.bf16.msra.mxu0 0
    %1395 = vmatprep.subr.bf16.mxu0 0
    %1396 = vmatpush2.bf16.msra.mxu0 0
    %1397 = vmatprep.subr.bf16.mxu0 0
    %1398 = vmatpush2.bf16.msra.mxu0 0
    %1399 = vmatprep.subr.bf16.mxu0 0
    %1400 = vmatpush2.bf16.msra.mxu0 0
    %1401 = vmatprep.mubr.bf16.mxu0 0
    %1402 = vmatmul.mubr.bf16.gmra.mxu0 %v1367
    %v1403 = vpop.f32.mrf.mxu0
    %v1404 = vadd.f32 0.0, %v1403
    %v1405 = vpop.f32.mrf.mxu0
    %v1406 = vpop.f32.mrf.mxu0
    %v1407 = vadd.f32 0.0, %v1406
    %v1408 = vpop.f32.mrf.mxu0
    %1409 = vdwg.mxu0
    %v1411 = vsel %vm1273, %v1363, 0
    %1413 = vmatprep.subr.bf16.mxu0 0
    %1414 = vmatpush1.bf16.msra.mxu0 0
    %1415 = vmatprep.subr.bf16.mxu0 0
    %1416 = vmatpush1.bf16.msra.mxu0 0
    %1417 = vmatprep.subr.bf16.mxu0 0
    %1418 = vmatpush1.bf16.msra.mxu0 0
    %1419 = vmatprep.subr.bf16.mxu0 0
    %1420 = vmatpush1.bf16.msra.mxu0 0
    %1421 = vmatprep.subr.bf16.mxu0 0
    %1422 = vmatpush1.bf16.msra.mxu0 0
    %1423 = vmatprep.subr.bf16.mxu0 0
    %1424 = vmatpush1.bf16.msra.mxu0 0
    %1425 = vmatprep.subr.bf16.mxu0 0
    %1426 = vmatpush1.bf16.msra.mxu0 0
    %1427 = vmatprep.subr.bf16.mxu0 0
    %1428 = vmatpush1.bf16.msra.mxu0 %v1055
    %1429 = vmatprep.subr.bf16.mxu0 0
    %1430 = vmatpush2.bf16.msra.mxu0 0
    %1431 = vmatprep.subr.bf16.mxu0 0
    %1432 = vmatpush2.bf16.msra.mxu0 0
    %1433 = vmatprep.subr.bf16.mxu0 0
    %1434 = vmatpush2.bf16.msra.mxu0 0
    %1435 = vmatprep.subr.bf16.mxu0 0
    %1436 = vmatpush2.bf16.msra.mxu0 0
    %1437 = vmatprep.subr.bf16.mxu0 0
    %1438 = vmatpush2.bf16.msra.mxu0 0
    %1439 = vmatprep.subr.bf16.mxu0 0
    %1440 = vmatpush2.bf16.msra.mxu0 0
    %1441 = vmatprep.subr.bf16.mxu0 0
    %1442 = vmatpush2.bf16.msra.mxu0 0
    %1443 = vmatprep.subr.bf16.mxu0 0
    %1444 = vmatpush2.bf16.msra.mxu0 0
    %1445 = vmatprep.mubr.bf16.mxu0 0
    %1446 = vmatmul.mubr.bf16.gmra.mxu0 %v1411
    %v1447 = vpop.f32.mrf.mxu0
    %v1448 = vadd.f32 0.0, %v1447
    %v1449 = vpop.f32.mrf.mxu0
    %v1450 = vpop.f32.mrf.mxu0
    %v1451 = vadd.f32 0.0, %v1450
    %v1452 = vpop.f32.mrf.mxu0
    %1453 = vdwg.mxu0
    %v1455 = vsel %vm1273, %v1364, 0
    %1457 = vmatprep.subr.bf16.mxu0 0
    %1458 = vmatpush1.bf16.msra.mxu0 0
    %1459 = vmatprep.subr.bf16.mxu0 0
    %1460 = vmatpush1.bf16.msra.mxu0 0
    %1461 = vmatprep.subr.bf16.mxu0 0
    %1462 = vmatpush1.bf16.msra.mxu0 0
    %1463 = vmatprep.subr.bf16.mxu0 0
    %1464 = vmatpush1.bf16.msra.mxu0 0
    %1465 = vmatprep.subr.bf16.mxu0 0
    %1466 = vmatpush1.bf16.msra.mxu0 0
    %1467 = vmatprep.subr.bf16.mxu0 0
    %1468 = vmatpush1.bf16.msra.mxu0 0
    %1469 = vmatprep.subr.bf16.mxu0 0
    %1470 = vmatpush1.bf16.msra.mxu0 0
    %1471 = vmatprep.subr.bf16.mxu0 0
    %1472 = vmatpush1.bf16.msra.mxu0 %v1056
    %1473 = vmatprep.subr.bf16.mxu0 0
    %1474 = vmatpush2.bf16.msra.mxu0 0
    %1475 = vmatprep.subr.bf16.mxu0 0
    %1476 = vmatpush2.bf16.msra.mxu0 0
    %1477 = vmatprep.subr.bf16.mxu0 0
    %1478 = vmatpush2.bf16.msra.mxu0 0
    %1479 = vmatprep.subr.bf16.mxu0 0
    %1480 = vmatpush2.bf16.msra.mxu0 0
    %1481 = vmatprep.subr.bf16.mxu0 0
    %1482 = vmatpush2.bf16.msra.mxu0 0
    %1483 = vmatprep.subr.bf16.mxu0 0
    %1484 = vmatpush2.bf16.msra.mxu0 0
    %1485 = vmatprep.subr.bf16.mxu0 0
    %1486 = vmatpush2.bf16.msra.mxu0 0
    %1487 = vmatprep.subr.bf16.mxu0 0
    %1488 = vmatpush2.bf16.msra.mxu0 0
    %1489 = vmatprep.mubr.bf16.mxu0 0
    %1490 = vmatmul.mubr.bf16.gmra.mxu0 %v1455
    %v1491 = vpop.f32.mrf.mxu0
    %v1492 = vadd.f32 0.0, %v1491
    %v1493 = vpop.f32.mrf.mxu0
    %v1494 = vpop.f32.mrf.mxu0
    %v1495 = vadd.f32 0.0, %v1494
    %v1496 = vpop.f32.mrf.mxu0
    %1497 = vdwg.mxu0
    %v1499 = vsel %vm1273, %v1365, 0
    %1501 = vmatprep.subr.bf16.mxu0 0
    %1502 = vmatpush1.bf16.msra.mxu0 0
    %1503 = vmatprep.subr.bf16.mxu0 0
    %1504 = vmatpush1.bf16.msra.mxu0 0
    %1505 = vmatprep.subr.bf16.mxu0 0
    %1506 = vmatpush1.bf16.msra.mxu0 0
    %1507 = vmatprep.subr.bf16.mxu0 0
    %1508 = vmatpush1.bf16.msra.mxu0 0
    %1509 = vmatprep.subr.bf16.mxu0 0
    %1510 = vmatpush1.bf16.msra.mxu0 0
    %1511 = vmatprep.subr.bf16.mxu0 0
    %1512 = vmatpush1.bf16.msra.mxu0 0
    %1513 = vmatprep.subr.bf16.mxu0 0
    %1514 = vmatpush1.bf16.msra.mxu0 0
    %1515 = vmatprep.subr.bf16.mxu0 0
    %1516 = vmatpush1.bf16.msra.mxu0 %v1057
    %1517 = vmatprep.subr.bf16.mxu0 0
    %1518 = vmatpush2.bf16.msra.mxu0 0
    %1519 = vmatprep.subr.bf16.mxu0 0
    %1520 = vmatpush2.bf16.msra.mxu0 0
    %1521 = vmatprep.subr.bf16.mxu0 0
    %1522 = vmatpush2.bf16.msra.mxu0 0
    %1523 = vmatprep.subr.bf16.mxu0 0
    %1524 = vmatpush2.bf16.msra.mxu0 0
    %1525 = vmatprep.subr.bf16.mxu0 0
    %1526 = vmatpush2.bf16.msra.mxu0 0
    %1527 = vmatprep.subr.bf16.mxu0 0
    %1528 = vmatpush2.bf16.msra.mxu0 0
    %1529 = vmatprep.subr.bf16.mxu0 0
    %1530 = vmatpush2.bf16.msra.mxu0 0
    %1531 = vmatprep.subr.bf16.mxu0 0
    %1532 = vmatpush2.bf16.msra.mxu0 0
    %1533 = vmatprep.mubr.bf16.mxu0 0
    %1534 = vmatmul.mubr.bf16.gmra.mxu0 %v1499
    %v1535 = vpop.f32.mrf.mxu0
    %v1536 = vadd.f32 0.0, %v1535
    %v1537 = vpop.f32.mrf.mxu0
    %v1538 = vpop.f32.mrf.mxu0
    %v1539 = vadd.f32 0.0, %v1538
    %v1540 = vpop.f32.mrf.mxu0
    %1541 = vdwg.mxu0
    %v1542 = vcombine.low %v1404, %v1492
    %v1543 = vcombine.high %v1404, %v1492
    %v1545 = vunpack.c.l.s4 1983009808
    %v1546 = vunpack.c.0.s8 %v1545
    %v1547 = vlaneseq
    %v1548 = vshrl.u32 %v1547, 7
    %v1549 = vsub.s32 %v1546, %v1548
    %v1550 = vrot.slane %v1542, %v1549
    %v1552 = vunpack.c.l.s4 1983009808
    %v1553 = vunpack.c.0.s8 %v1552
    %v1554 = vlaneseq
    %v1555 = vshrl.u32 %v1554, 7
    %v1556 = vsub.s32 %v1553, %v1555
    %v1557 = vrot.slane %v1543, %v1556
    %v1558 = vcombine.low %v1448, %v1536
    %v1559 = vcombine.high %v1448, %v1536
    %v1561 = vunpack.c.l.s4 1983009808
    %v1562 = vunpack.c.0.s8 %v1561
    %v1563 = vlaneseq
    %v1564 = vshrl.u32 %v1563, 7
    %v1565 = vsub.s32 %v1562, %v1564
    %v1566 = vrot.slane %v1558, %v1565
    %v1568 = vunpack.c.l.s4 1983009808
    %v1569 = vunpack.c.0.s8 %v1568
    %v1570 = vlaneseq
    %v1571 = vshrl.u32 %v1570, 7
    %v1572 = vsub.s32 %v1569, %v1571
    %v1573 = vrot.slane %v1559, %v1572
    %v1574 = vcombine.low %v1550, %v1566
    %v1575 = vcombine.high %v1550, %v1566
    %v1577 = vunpack.c.l.s4 1934713408
    %v1578 = vunpack.c.0.s8 %v1577
    %v1579 = vlaneseq
    %v1580 = vshrl.u32 %v1579, 7
    %v1581 = vsub.s32 %v1578, %v1580
    %v1582 = vrot.slane %v1574, %v1581
    %v1584 = vunpack.c.l.s4 1934713408
    %v1585 = vunpack.c.0.s8 %v1584
    %v1586 = vlaneseq
    %v1587 = vshrl.u32 %v1586, 7
    %v1588 = vsub.s32 %v1585, %v1587
    %v1589 = vrot.slane %v1575, %v1588
    %v1590 = vcombine.low %v1557, %v1573
    %v1591 = vcombine.high %v1557, %v1573
    %v1593 = vunpack.c.l.s4 1934713408
    %v1594 = vunpack.c.0.s8 %v1593
    %v1595 = vlaneseq
    %v1596 = vshrl.u32 %v1595, 7
    %v1597 = vsub.s32 %v1594, %v1596
    %v1598 = vrot.slane %v1590, %v1597
    %v1600 = vunpack.c.l.s4 1934713408
    %v1601 = vunpack.c.0.s8 %v1600
    %v1602 = vlaneseq
    %v1603 = vshrl.u32 %v1602, 7
    %v1604 = vsub.s32 %v1601, %v1603
    %v1605 = vrot.slane %v1591, %v1604
    %v1606 = vcombine.high %v1582, 0.0
    %v1607 = vcombine.high %v1589, 0.0
    %v1608 = vcombine.high %v1598, 0.0
    %v1609 = vcombine.high %v1605, 0.0
    %v1610 = vcombine.low %v1407, %v1495
    %v1611 = vcombine.high %v1407, %v1495
    %v1613 = vunpack.c.l.s4 1983009808
    %v1614 = vunpack.c.0.s8 %v1613
    %v1615 = vlaneseq
    %v1616 = vshrl.u32 %v1615, 7
    %v1617 = vsub.s32 %v1614, %v1616
    %v1618 = vrot.slane %v1610, %v1617
    %v1620 = vunpack.c.l.s4 1983009808
    %v1621 = vunpack.c.0.s8 %v1620
    %v1622 = vlaneseq
    %v1623 = vshrl.u32 %v1622, 7
    %v1624 = vsub.s32 %v1621, %v1623
    %v1625 = vrot.slane %v1611, %v1624
    %v1626 = vcombine.low %v1451, %v1539
    %v1627 = vcombine.high %v1451, %v1539
    %v1629 = vunpack.c.l.s4 1983009808
    %v1630 = vunpack.c.0.s8 %v1629
    %v1631 = vlaneseq
    %v1632 = vshrl.u32 %v1631, 7
    %v1633 = vsub.s32 %v1630, %v1632
    %v1634 = vrot.slane %v1626, %v1633
    %v1636 = vunpack.c.l.s4 1983009808
    %v1637 = vunpack.c.0.s8 %v1636
    %v1638 = vlaneseq
    %v1639 = vshrl.u32 %v1638, 7
    %v1640 = vsub.s32 %v1637, %v1639
    %v1641 = vrot.slane %v1627, %v1640
    %v1642 = vcombine.low %v1618, %v1634
    %v1643 = vcombine.high %v1618, %v1634
    %v1645 = vunpack.c.l.s4 1934713408
    %v1646 = vunpack.c.0.s8 %v1645
    %v1647 = vlaneseq
    %v1648 = vshrl.u32 %v1647, 7
    %v1649 = vsub.s32 %v1646, %v1648
    %v1650 = vrot.slane %v1642, %v1649
    %v1652 = vunpack.c.l.s4 1934713408
    %v1653 = vunpack.c.0.s8 %v1652
    %v1654 = vlaneseq
    %v1655 = vshrl.u32 %v1654, 7
    %v1656 = vsub.s32 %v1653, %v1655
    %v1657 = vrot.slane %v1643, %v1656
    %v1658 = vcombine.low %v1625, %v1641
    %v1659 = vcombine.high %v1625, %v1641
    %v1661 = vunpack.c.l.s4 1934713408
    %v1662 = vunpack.c.0.s8 %v1661
    %v1663 = vlaneseq
    %v1664 = vshrl.u32 %v1663, 7
    %v1665 = vsub.s32 %v1662, %v1664
    %v1666 = vrot.slane %v1658, %v1665
    %v1668 = vunpack.c.l.s4 1934713408
    %v1669 = vunpack.c.0.s8 %v1668
    %v1670 = vlaneseq
    %v1671 = vshrl.u32 %v1670, 7
    %v1672 = vsub.s32 %v1669, %v1671
    %v1673 = vrot.slane %v1659, %v1672
    %v1674 = vcombine.high %v1650, 0.0
    %v1675 = vcombine.high %v1657, 0.0
    %v1676 = vcombine.high %v1666, 0.0
    %v1677 = vcombine.high %v1673, 0.0
    %v1678 = vcombine.low %v1582, %v1589
    %v1680 = vunpack.c.l.s4 1983009808
    %v1681 = vunpack.c.0.s8 %v1680
    %v1682 = vlaneseq
    %v1683 = vshrl.u32 %v1682, 7
    %v1684 = vsub.s32 %v1681, %v1683
    %v1685 = vrot.slane %v1678, %v1684
    %v1686 = vcombine.low %v1606, %v1607
    %v1688 = vunpack.c.l.s4 1983009808
    %v1689 = vunpack.c.0.s8 %v1688
    %v1690 = vlaneseq
    %v1691 = vshrl.u32 %v1690, 7
    %v1692 = vsub.s32 %v1689, %v1691
    %v1693 = vrot.slane %v1686, %v1692
    %v1694 = vcombine.low %v1598, %v1605
    %v1696 = vunpack.c.l.s4 1983009808
    %v1697 = vunpack.c.0.s8 %v1696
    %v1698 = vlaneseq
    %v1699 = vshrl.u32 %v1698, 7
    %v1700 = vsub.s32 %v1697, %v1699
    %v1701 = vrot.slane %v1694, %v1700
    %v1702 = vcombine.low %v1608, %v1609
    %v1704 = vunpack.c.l.s4 1983009808
    %v1705 = vunpack.c.0.s8 %v1704
    %v1706 = vlaneseq
    %v1707 = vshrl.u32 %v1706, 7
    %v1708 = vsub.s32 %v1705, %v1707
    %v1709 = vrot.slane %v1702, %v1708
    %v1710 = vcombine.low %v1685, %v1693
    %v1711 = vcombine.high %v1685, %v1693
    %v1713 = vunpack.c.l.s4 1934713408
    %v1714 = vunpack.c.0.s8 %v1713
    %v1715 = vlaneseq
    %v1716 = vshrl.u32 %v1715, 7
    %v1717 = vsub.s32 %v1714, %v1716
    %v1718 = vrot.slane %v1710, %v1717
    %v1720 = vunpack.c.l.s4 1934713408
    %v1721 = vunpack.c.0.s8 %v1720
    %v1722 = vlaneseq
    %v1723 = vshrl.u32 %v1722, 7
    %v1724 = vsub.s32 %v1721, %v1723
    %v1725 = vrot.slane %v1711, %v1724
    %v1726 = vcombine.low %v1701, %v1709
    %v1727 = vcombine.high %v1701, %v1709
    %v1729 = vunpack.c.l.s4 1934713408
    %v1730 = vunpack.c.0.s8 %v1729
    %v1731 = vlaneseq
    %v1732 = vshrl.u32 %v1731, 7
    %v1733 = vsub.s32 %v1730, %v1732
    %v1734 = vrot.slane %v1726, %v1733
    %v1736 = vunpack.c.l.s4 1934713408
    %v1737 = vunpack.c.0.s8 %v1736
    %v1738 = vlaneseq
    %v1739 = vshrl.u32 %v1738, 7
    %v1740 = vsub.s32 %v1737, %v1739
    %v1741 = vrot.slane %v1727, %v1740
    %v1742 = vcombine.low %v1718, %v1734
    %v1743 = vcombine.high %v1718, %v1734
    %v1744 = vcombine.low %v1725, %v1741
    %v1745 = vcombine.high %v1725, %v1741
    %v1746 = vcombine.low %v1650, %v1657
    %v1748 = vunpack.c.l.s4 1983009808
    %v1749 = vunpack.c.0.s8 %v1748
    %v1750 = vlaneseq
    %v1751 = vshrl.u32 %v1750, 7
    %v1752 = vsub.s32 %v1749, %v1751
    %v1753 = vrot.slane %v1746, %v1752
    %v1754 = vcombine.low %v1674, %v1675
    %v1756 = vunpack.c.l.s4 1983009808
    %v1757 = vunpack.c.0.s8 %v1756
    %v1758 = vlaneseq
    %v1759 = vshrl.u32 %v1758, 7
    %v1760 = vsub.s32 %v1757, %v1759
    %v1761 = vrot.slane %v1754, %v1760
    %v1762 = vcombine.low %v1666, %v1673
    %v1764 = vunpack.c.l.s4 1983009808
    %v1765 = vunpack.c.0.s8 %v1764
    %v1766 = vlaneseq
    %v1767 = vshrl.u32 %v1766, 7
    %v1768 = vsub.s32 %v1765, %v1767
    %v1769 = vrot.slane %v1762, %v1768
    %v1770 = vcombine.low %v1676, %v1677
    %v1772 = vunpack.c.l.s4 1983009808
    %v1773 = vunpack.c.0.s8 %v1772
    %v1774 = vlaneseq
    %v1775 = vshrl.u32 %v1774, 7
    %v1776 = vsub.s32 %v1773, %v1775
    %v1777 = vrot.slane %v1770, %v1776
    %v1778 = vcombine.low %v1753, %v1761
    %v1779 = vcombine.high %v1753, %v1761
    %v1781 = vunpack.c.l.s4 1934713408
    %v1782 = vunpack.c.0.s8 %v1781
    %v1783 = vlaneseq
    %v1784 = vshrl.u32 %v1783, 7
    %v1785 = vsub.s32 %v1782, %v1784
    %v1786 = vrot.slane %v1778, %v1785
    %v1788 = vunpack.c.l.s4 1934713408
    %v1789 = vunpack.c.0.s8 %v1788
    %v1790 = vlaneseq
    %v1791 = vshrl.u32 %v1790, 7
    %v1792 = vsub.s32 %v1789, %v1791
    %v1793 = vrot.slane %v1779, %v1792
    %v1794 = vcombine.low %v1769, %v1777
    %v1795 = vcombine.high %v1769, %v1777
    %v1797 = vunpack.c.l.s4 1934713408
    %v1798 = vunpack.c.0.s8 %v1797
    %v1799 = vlaneseq
    %v1800 = vshrl.u32 %v1799, 7
    %v1801 = vsub.s32 %v1798, %v1800
    %v1802 = vrot.slane %v1794, %v1801
    %v1804 = vunpack.c.l.s4 1934713408
    %v1805 = vunpack.c.0.s8 %v1804
    %v1806 = vlaneseq
    %v1807 = vshrl.u32 %v1806, 7
    %v1808 = vsub.s32 %v1805, %v1807
    %v1809 = vrot.slane %v1795, %v1808
    %v1810 = vcombine.low %v1786, %v1802
    %v1811 = vcombine.high %v1786, %v1802
    %v1812 = vcombine.low %v1793, %v1809
    %v1813 = vcombine.high %v1793, %v1809
    %1816 = vrot.lane.b32.xlu0 %v1743, 8
    %v1817 = vpop.permute.xlu0 %1816
    %1818 = vrot.lane.b32.xlu0 %v1811, 8
    %v1819 = vpop.permute.xlu0 %1818
    %1824 = vrot.lane.b32.xlu0 %v1744, 16
    %v1825 = vpop.permute.xlu0 %1824
    %1826 = vrot.lane.b32.xlu0 %v1812, 16
    %v1827 = vpop.permute.xlu0 %1826
    %1832 = vrot.lane.b32.xlu0 %v1745, 24
    %v1833 = vpop.permute.xlu0 %1832
    %1834 = vrot.lane.b32.xlu0 %v1813, 24
    %v1835 = vpop.permute.xlu0 %1834
    %v1838 = vsel %vm1058, %v1742, %v1817
    %v1839 = vsel %vm1058, %v1810, %v1819
    %v1840 = vsel %vm1273, %v1838, %v1825
    %v1841 = vsel %vm1273, %v1839, %v1827
    %vm1842 = vcmask 195584
    %v1843 = vsel %vm1842, %v1840, %v1833
    %v1844 = vsel %vm1842, %v1841, %v1835
    %v1845 = vpack.c.bf16 %v1844, %v1843
    %v1846 = vld [vmem:[%s5] sm:$0xf]
    %v1847 = vld [vmem:[%s5 + $0x4] sm:$0xf]
    %v1848 = vld [vmem:[%s5 + $0x8] sm:$0xf]
    %v1849 = vld [vmem:[%s5 + $0xc] sm:$0xf]
    %v1850 = vld [vmem:[%s6] sm:$0x1]
    %v1852 = vlaneseq
    %v1853 = vshrl.u32 %v1852, 7
    %v1854 = vsub.s32 0, %v1853
    %v1855 = vrot.slane %v1850, %v1854
    %v1861 = vunpack.c.l.b16 %v1846
    %v1862 = vunpack.c.l.b16 %v1847
    %v1863 = vunpack.c.l.b16 %v1848
    %v1864 = vunpack.c.l.b16 %v1849
    %v1865 = vpack.c.b16 %v1862, %v1861
    %v1866 = vpack.c.b16 %v1864, %v1863
    %v1870 = vsel %vm50, %v1845, 0
    %1872 = vmatprep.subr.bf16.mxu0 0
    %1873 = vmatpush1.bf16.msra.mxu0 0
    %1874 = vmatprep.subr.bf16.mxu0 0
    %1875 = vmatpush1.bf16.msra.mxu0 0
    %1876 = vmatprep.subr.bf16.mxu0 0
    %1877 = vmatpush1.bf16.msra.mxu0 0
    %1878 = vmatprep.subr.bf16.mxu0 0
    %1879 = vmatpush1.bf16.msra.mxu0 0
    %1880 = vmatprep.subr.bf16.mxu0 0
    %1881 = vmatpush1.bf16.msra.mxu0 0
    %1882 = vmatprep.subr.bf16.mxu0 0
    %1883 = vmatpush1.bf16.msra.mxu0 0
    %1884 = vmatprep.subr.bf16.mxu0 0
    %1885 = vmatpush1.bf16.msra.mxu0 %v1866
    %1886 = vmatprep.subr.bf16.mxu0 0
    %1887 = vmatpush1.bf16.msra.mxu0 %v1865
    %1888 = vmatprep.subr.bf16.mxu0 0
    %1889 = vmatpush2.bf16.msra.mxu0 0
    %1890 = vmatprep.subr.bf16.mxu0 0
    %1891 = vmatpush2.bf16.msra.mxu0 0
    %1892 = vmatprep.subr.bf16.mxu0 0
    %1893 = vmatpush2.bf16.msra.mxu0 0
    %1894 = vmatprep.subr.bf16.mxu0 0
    %1895 = vmatpush2.bf16.msra.mxu0 0
    %1896 = vmatprep.subr.bf16.mxu0 0
    %1897 = vmatpush2.bf16.msra.mxu0 0
    %1898 = vmatprep.subr.bf16.mxu0 0
    %1899 = vmatpush2.bf16.msra.mxu0 0
    %1900 = vmatprep.subr.bf16.mxu0 0
    %1901 = vmatpush2.bf16.msra.mxu0 0
    %1902 = vmatprep.subr.bf16.mxu0 0
    %1903 = vmatpush2.bf16.msra.mxu0 0
    %1904 = vmatprep.mubr.bf16.mxu0 0
    %1905 = vmatmul.mubr.bf16.gmra.mxu0 %v1870
    %v1906 = vpop.f32.mrf.mxu0
    %v1907 = vadd.f32 %v1855, %v1906
    %v1908 = vpop.f32.mrf.mxu0
    %v1909 = vpop.f32.mrf.mxu0
    %v1910 = vadd.f32 %v1855, %v1909
    %v1911 = vpop.f32.mrf.mxu0
    %1912 = vdwg.mxu0
    %v1913 = vadd.f32 %v46, %v1907
    %v1914 = vadd.f32 %v47, %v1910
    %v1915 = vld [vmem:[%s7] sm:$0x1]
    %v1916 = vld [vmem:[%s8] sm:$0x1]
    %v1917 = vsel %vm50, %v1913, 0.0
    %1918 = vadd.xlane.f32.xlu0 %v1917
    %v1919 = vpop.xlane.xlu0 %1918
    %v1920 = vsel %vm50, %v1914, 0.0
    %1921 = vadd.xlane.f32.xlu0 %v1920
    %v1922 = vpop.xlane.xlu0 %1921
    %v1923 = vmul.f32 %v1919, %v57
    %v1924 = vmul.f32 %v1922, %v57
    %v1925 = vsub.f32 %v1913, %v1923
    %v1926 = vsub.f32 %v1914, %v1924
    %v1927 = vmul.f32 %v1925, %v1925
    %v1928 = vmul.f32 %v1926, %v1926
    %v1929 = vsel %vm50, %v1927, 0.0
    %1930 = vadd.xlane.f32.xlu0 %v1929
    %v1931 = vpop.xlane.xlu0 %1930
    %v1932 = vsel %vm50, %v1928, 0.0
    %1933 = vadd.xlane.f32.xlu0 %v1932
    %v1934 = vpop.xlane.xlu0 %1933
    %v1935 = vmul.f32 %v1931, %v57
    %v1936 = vmul.f32 %v1934, %v57
    %v1937 = vadd.f32 %v1935, 1e-05
    %v1938 = vadd.f32 %v1936, 1e-05
    %v1939 = vrsqrt.pop %v1937
    %v1940 = vrsqrt.pop %v1938
    %v1941 = vmul.f32 %v1925, %v1939
    %v1942 = vmul.f32 %v1926, %v1940
    %v1944 = vlaneseq
    %v1945 = vshrl.u32 %v1944, 7
    %v1946 = vsub.s32 0, %v1945
    %v1947 = vrot.slane %v1915, %v1946
    %v1949 = vmul.f32 %v1941, %v1947
    %v1950 = vmul.f32 %v1942, %v1947
    %v1952 = vlaneseq
    %v1953 = vshrl.u32 %v1952, 7
    %v1954 = vsub.s32 0, %v1953
    %v1955 = vrot.slane %v1916, %v1954
    %v1957 = vadd.f32 %v1949, %v1955
    %v1958 = vadd.f32 %v1950, %v1955
    %v1959 = vpack.c.bf16 %v1958, %v1957
    %v1960 = vld [vmem:[%s9] sm:$0xf]
    %v1961 = vld [vmem:[%s9 + $0x4] sm:$0xf]
    %v1962 = vld [vmem:[%s9 + $0x8] sm:$0xf]
    %v1963 = vld [vmem:[%s9 + $0xc] sm:$0xf]
    %v1964 = vld [vmem:[%s10] sm:$0x1]
    %v1966 = vlaneseq
    %v1967 = vshrl.u32 %v1966, 7
    %v1968 = vsub.s32 0, %v1967
    %v1969 = vrot.slane %v1964, %v1968
    %v1975 = vunpack.c.l.b16 %v1960
    %v1976 = vunpack.c.l.b16 %v1961
    %v1977 = vunpack.c.l.b16 %v1962
    %v1978 = vunpack.c.l.b16 %v1963
    %v1979 = vpack.c.b16 %v1976, %v1975
    %v1980 = vpack.c.b16 %v1978, %v1977
    %v1984 = vsel %vm50, %v1959, 0
    %1986 = vmatprep.subr.bf16.mxu0 0
    %1987 = vmatpush1.bf16.msra.mxu0 0
    %1988 = vmatprep.subr.bf16.mxu0 0
    %1989 = vmatpush1.bf16.msra.mxu0 0
    %1990 = vmatprep.subr.bf16.mxu0 0
    %1991 = vmatpush1.bf16.msra.mxu0 0
    %1992 = vmatprep.subr.bf16.mxu0 0
    %1993 = vmatpush1.bf16.msra.mxu0 0
    %1994 = vmatprep.subr.bf16.mxu0 0
    %1995 = vmatpush1.bf16.msra.mxu0 0
    %1996 = vmatprep.subr.bf16.mxu0 0
    %1997 = vmatpush1.bf16.msra.mxu0 0
    %1998 = vmatprep.subr.bf16.mxu0 0
    %1999 = vmatpush1.bf16.msra.mxu0 %v1980
    %2000 = vmatprep.subr.bf16.mxu0 0
    %2001 = vmatpush1.bf16.msra.mxu0 %v1979
    %2002 = vmatprep.subr.bf16.mxu0 0
    %2003 = vmatpush2.bf16.msra.mxu0 0
    %2004 = vmatprep.subr.bf16.mxu0 0
    %2005 = vmatpush2.bf16.msra.mxu0 0
    %2006 = vmatprep.subr.bf16.mxu0 0
    %2007 = vmatpush2.bf16.msra.mxu0 0
    %2008 = vmatprep.subr.bf16.mxu0 0
    %2009 = vmatpush2.bf16.msra.mxu0 0
    %2010 = vmatprep.subr.bf16.mxu0 0
    %2011 = vmatpush2.bf16.msra.mxu0 0
    %2012 = vmatprep.subr.bf16.mxu0 0
    %2013 = vmatpush2.bf16.msra.mxu0 0
    %2014 = vmatprep.subr.bf16.mxu0 0
    %2015 = vmatpush2.bf16.msra.mxu0 0
    %2016 = vmatprep.subr.bf16.mxu0 0
    %2017 = vmatpush2.bf16.msra.mxu0 0
    %2018 = vmatprep.mubr.bf16.mxu0 0
    %2019 = vmatmul.mubr.bf16.gmra.mxu0 %v1984
    %v2020 = vpop.f32.mrf.mxu0
    %v2021 = vadd.f32 %v1969, %v2020
    %v2022 = vpop.f32.mrf.mxu0
    %v2023 = vpop.f32.mrf.mxu0
    %v2024 = vadd.f32 %v1969, %v2023
    %v2025 = vpop.f32.mrf.mxu0
    %2026 = vdwg.mxu0
    %v2027 = vmul.f32 %v2021, 0.5
    %v2028 = vmul.f32 %v2024, 0.5
    %v2029 = vmul.f32 %v2021, 0.044715
    %v2030 = vmul.f32 %v2024, 0.044715
    %v2031 = vmul.f32 %v2029, %v2021
    %v2032 = vmul.f32 %v2030, %v2024
    %v2033 = vmul.f32 %v2031, %v2021
    %v2034 = vmul.f32 %v2032, %v2024
    %v2035 = vadd.f32 %v2021, %v2033
    %v2036 = vadd.f32 %v2024, %v2034
    %v2037 = vmul.f32 %v2035, 0.7978846
    %v2038 = vmul.f32 %v2036, 0.7978846
    %v2039 = vtanh.pop %v2037
    %v2040 = vtanh.pop %v2038
    %v2041 = vadd.f32 %v2039, 1.0
    %v2042 = vadd.f32 %v2040, 1.0
    %v2043 = vmul.f32 %v2027, %v2041
    %v2044 = vmul.f32 %v2028, %v2042
    %v2045 = vpack.c.bf16 %v2044, %v2043
    %v2046 = vld [vmem:[%s11] sm:$0xf]
    %v2047 = vld [vmem:[%s11 + $0x4] sm:$0xf]
    %v2048 = vld [vmem:[%s11 + $0x8] sm:$0xf]
    %v2049 = vld [vmem:[%s11 + $0xc] sm:$0xf]
    %v2050 = vld [vmem:[%s11 + $0x10] sm:$0xf]
    %v2051 = vld [vmem:[%s11 + $0x14] sm:$0xf]
    %v2052 = vld [vmem:[%s11 + $0x18] sm:$0xf]
    %v2053 = vld [vmem:[%s11 + $0x1c] sm:$0xf]
    %v2054 = vld [vmem:[%s11 + $0x20] sm:$0xf]
    %v2055 = vld [vmem:[%s11 + $0x24] sm:$0xf]
    %v2056 = vld [vmem:[%s11 + $0x28] sm:$0xf]
    %v2057 = vld [vmem:[%s11 + $0x2c] sm:$0xf]
    %v2058 = vld [vmem:[%s11 + $0x30] sm:$0xf]
    %v2059 = vld [vmem:[%s11 + $0x34] sm:$0xf]
    %v2060 = vld [vmem:[%s11 + $0x38] sm:$0xf]
    %v2061 = vld [vmem:[%s11 + $0x3c] sm:$0xf]
    %v2062 = vld [vmem:[%s12] sm:$0x1]
    %v2064 = vlaneseq
    %v2065 = vshrl.u32 %v2064, 7
    %v2066 = vsub.s32 0, %v2065
    %v2067 = vrot.slane %v2062, %v2066
    %v2085 = vunpack.c.l.b16 %v2046
    %v2086 = vunpack.c.l.b16 %v2047
    %v2087 = vunpack.c.l.b16 %v2048
    %v2088 = vunpack.c.l.b16 %v2049
    %v2089 = vunpack.c.l.b16 %v2050
    %v2090 = vunpack.c.l.b16 %v2051
    %v2091 = vunpack.c.l.b16 %v2052
    %v2092 = vunpack.c.l.b16 %v2053
    %v2093 = vunpack.c.l.b16 %v2054
    %v2094 = vunpack.c.l.b16 %v2055
    %v2095 = vunpack.c.l.b16 %v2056
    %v2096 = vunpack.c.l.b16 %v2057
    %v2097 = vunpack.c.l.b16 %v2058
    %v2098 = vunpack.c.l.b16 %v2059
    %v2099 = vunpack.c.l.b16 %v2060
    %v2100 = vunpack.c.l.b16 %v2061
    %v2101 = vpack.c.b16 %v2086, %v2085
    %v2102 = vpack.c.b16 %v2088, %v2087
    %v2103 = vpack.c.b16 %v2090, %v2089
    %v2104 = vpack.c.b16 %v2092, %v2091
    %v2105 = vpack.c.b16 %v2094, %v2093
    %v2106 = vpack.c.b16 %v2096, %v2095
    %v2107 = vpack.c.b16 %v2098, %v2097
    %v2108 = vpack.c.b16 %v2100, %v2099
    %2117 = vmatprep.subr.bf16.mxu0 0
    %2118 = vmatpush1.bf16.msra.mxu0 %v2108
    %2119 = vmatprep.subr.bf16.mxu0 0
    %2120 = vmatpush1.bf16.msra.mxu0 %v2107
    %2121 = vmatprep.subr.bf16.mxu0 0
    %2122 = vmatpush1.bf16.msra.mxu0 %v2106
    %2123 = vmatprep.subr.bf16.mxu0 0
    %2124 = vmatpush1.bf16.msra.mxu0 %v2105
    %2125 = vmatprep.subr.bf16.mxu0 0
    %2126 = vmatpush1.bf16.msra.mxu0 %v2104
    %2127 = vmatprep.subr.bf16.mxu0 0
    %2128 = vmatpush1.bf16.msra.mxu0 %v2103
    %2129 = vmatprep.subr.bf16.mxu0 0
    %2130 = vmatpush1.bf16.msra.mxu0 %v2102
    %2131 = vmatprep.subr.bf16.mxu0 0
    %2132 = vmatpush1.bf16.msra.mxu0 %v2101
    %2133 = vmatprep.subr.bf16.mxu0 0
    %2134 = vmatpush2.bf16.msra.mxu0 0
    %2135 = vmatprep.subr.bf16.mxu0 0
    %2136 = vmatpush2.bf16.msra.mxu0 0
    %2137 = vmatprep.subr.bf16.mxu0 0
    %2138 = vmatpush2.bf16.msra.mxu0 0
    %2139 = vmatprep.subr.bf16.mxu0 0
    %2140 = vmatpush2.bf16.msra.mxu0 0
    %2141 = vmatprep.subr.bf16.mxu0 0
    %2142 = vmatpush2.bf16.msra.mxu0 0
    %2143 = vmatprep.subr.bf16.mxu0 0
    %2144 = vmatpush2.bf16.msra.mxu0 0
    %2145 = vmatprep.subr.bf16.mxu0 0
    %2146 = vmatpush2.bf16.msra.mxu0 0
    %2147 = vmatprep.subr.bf16.mxu0 0
    %2148 = vmatpush2.bf16.msra.mxu0 0
    %2149 = vmatprep.mubr.bf16.mxu0 0
    %2150 = vmatmul.mubr.bf16.gmra.mxu0 %v2045
    %v2151 = vpop.f32.mrf.mxu0
    %v2152 = vadd.f32 %v2067, %v2151
    %v2153 = vpop.f32.mrf.mxu0
    %v2154 = vpop.f32.mrf.mxu0
    %v2155 = vadd.f32 %v2067, %v2154
    %v2156 = vpop.f32.mrf.mxu0
    %2157 = vdwg.mxu0
    %v2158 = vadd.f32 %v1913, %v2152
    %v2159 = vadd.f32 %v1914, %v2155
    %2160 = vst.msk [vmem:[#allocation2] sm:$0xff] %vm50, %v2158
    %2161 = vst.msk [vmem:[#allocation2 + $0x8] sm:$0xff] %vm50, %v2159
    // Predicated region
    $region54: #{tpu_custom_call.1} parent=1 // pred_check
      _
    $region55: #{tpu_custom_call.1} parent=1 // pred_check_branch
      %2163 = sbr.rel (0) target = $region57
    $region56: #{tpu_custom_call.1} parent=1 // pred_region
      %s2165 = ssub.s32 256, 256
      %2166 = vsyncadd [#allocation3], %s2165
      %s2167 = sshll.u32 [#allocation2], 4
      %s2168 = int_to_ptr.vmem [resolvable:$true] %s2167
      %2173 = dma.vmem_to_hbm [thread:$0]  %s2168, 256, %s13, [#allocation3], 128, 128, 8
    $region57: #{tpu_custom_call.1} parent=1 // pred_fallthru
      _
    // Predicated region
    $region58: #{tpu_custom_call.1} parent=1 // pred_check
      _
    $region59: #{tpu_custom_call.1} parent=1 // pred_check_branch
      %2175 = sbr.rel (0) target = $region61
    $region60: #{tpu_custom_call.1} parent=1 // pred_region
      %2176 = dma.done [#allocation3], 256
    $region61: #{tpu_custom_call.1} parent=1 // pred_fallthru
      _
    %2177 = vsyncpa [#allocation3], 1

</llo_original>
